<compile_context>
chip_gen: v7x
topology: tpu7x:2x2x1
jax: 0.10.0
libtpu: 0.0.40
codegen_flags: <defaults>
</compile_context>

<pallas_src>
import functools

import jax
import jax.numpy as jnp
from jax.experimental import pallas as pl
from jax.experimental.pallas import tpu as pltpu

_LANE = 128


# ----------------------------- kernel helpers ------------------------------

def _ln(x, g, b, eps=1e-6):
    mu = jnp.mean(x, axis=-1, keepdims=True)
    var = jnp.mean(jnp.square(x - mu), axis=-1, keepdims=True)
    return (x - mu) * jax.lax.rsqrt(var + eps) * g + b


# Rows of the packed vector-parameter slab (see init_params):
#  0/1 : corrector LN(inputs) gamma/beta        (width C)
#  2/3 : corrector LN(slots)  gamma/beta        (width D)
#  4/5 : corrector LN(update) gamma/beta        (width D)
#  6/7 : corrector MLP b1 (Hm) / b2 (D)
#  8/9 : predictor LN1 gamma/beta               (width D)
# 10/11: predictor LN2 gamma/beta               (width D)
# 12/13: predictor MLP b1 (Hf) / b2 (D)


def _wblk(w_ref, layout, name):
    """Static row-slice of the packed weight slab -> (rows, 128) bf16 block."""
    off, rows = layout[name]
    return w_ref[off:off + rows, :]


def _corrector(x, slots, mask, vp, w_ref, layout):
    """Slot-attention-style corrector: cross attention slots -> inputs,
    softmax over the slot axis, weighted-mean aggregation, residual+MLP."""
    Bb, N, C = x.shape
    _, S, D = slots.shape

    # fold batch into matmul rows for LN / projections / MLP
    x2 = x.reshape(Bb * N, C)
    s2 = slots.reshape(Bb * S, D)

    xn = _ln(x2, vp[0:1, :C], vp[1:2, :C]).astype(jnp.bfloat16)
    sn = _ln(s2, vp[2:3, :D], vp[3:4, :D]).astype(jnp.bfloat16)

    # separate dots against 128-lane-padded weight blocks (query scale is
    # folded into c_wq at init); padded lanes are exactly zero.
    q = jnp.dot(sn, _wblk(w_ref, layout, "c_wq"),
                preferred_element_type=jnp.float32)               # (Bb*S, 128)
    k = jnp.dot(xn, _wblk(w_ref, layout, "c_wk"),
                preferred_element_type=jnp.float32)               # (Bb*N, 128)
    v = jnp.dot(xn, _wblk(w_ref, layout, "c_wv"),
                preferred_element_type=jnp.float32)               # (Bb*N, 128)

    q3 = q.reshape(Bb, S, _LANE).astype(jnp.bfloat16)
    k3 = k.reshape(Bb, N, _LANE).astype(jnp.bfloat16)
    v3 = v.reshape(Bb, N, _LANE).astype(jnp.bfloat16)

    # q @ k^T: contract the full 128-lane feature dim (zero padding adds 0).
    logits = jnp.einsum("bsd,bnd->bsn", q3, k3,
                        preferred_element_type=jnp.float32)       # (Bb, S, N)

    # softmax over slots (axis 1) for every input location (SAVi convention)
    m = jnp.max(logits, axis=1, keepdims=True)
    e = jnp.exp(logits - m)
    attn = e * pl.reciprocal(jnp.sum(e, axis=1, keepdims=True), approx=True)
    # zero attention at padded input positions so they neither appear in the
    # returned attn nor contribute to the weighted-mean slot update.
    attn = attn * mask                                            # mask (Bb,1,N)

    # weighted mean over inputs
    # TODO(synk): eps is added to the denominator sum instead of to attn
    # before normalization (differs from SAVi when every position is masked).
    attn_w = attn * pl.reciprocal(
        jnp.sum(attn, axis=-1, keepdims=True) + 1e-8, approx=True)
    upd = jnp.einsum("bsn,bnd->bsd", attn_w.astype(jnp.bfloat16), v3,
                     preferred_element_type=jnp.float32)          # (Bb, S, 128)

    corrected2 = s2 + upd.reshape(Bb * S, _LANE)[:, :D]
    # TODO(synk): SAVi's SlotAttention corrector uses a GRUCell for the slot
    # update; a residual + MLP update is used here (Processor semantics are
    # agnostic to which corrector module is plugged in).
    cn = _ln(corrected2, vp[4:5, :D], vp[5:6, :D]).astype(jnp.bfloat16)
    h = jnp.maximum(
        jnp.dot(cn, _wblk(w_ref, layout, "c_w1"),
                preferred_element_type=jnp.float32) + vp[6:7, :], 0.0)
    corrected2 = corrected2 + jnp.dot(
        h.astype(jnp.bfloat16), _wblk(w_ref, layout, "c_w2"),
        preferred_element_type=jnp.float32)[:, :D] + vp[7:8, :D]
    return corrected2.reshape(Bb, S, D), attn


def _predictor(slots3, vp, w_ref, layout):
    """Transformer-style latent transition: pre-norm single-head
    self-attention over slots + pre-norm MLP, both residual."""
    Bb, S, D = slots3.shape
    s2 = slots3.reshape(Bb * S, D)

    sn = _ln(s2, vp[8:9, :D], vp[9:10, :D]).astype(jnp.bfloat16)
    q = jnp.dot(sn, _wblk(w_ref, layout, "p_wq"),
                preferred_element_type=jnp.float32)               # q pre-scaled
    k = jnp.dot(sn, _wblk(w_ref, layout, "p_wk"),
                preferred_element_type=jnp.float32)
    v = jnp.dot(sn, _wblk(w_ref, layout, "p_wv"),
                preferred_element_type=jnp.float32)

    q3 = q.reshape(Bb, S, _LANE).astype(jnp.bfloat16)
    k3 = k.reshape(Bb, S, _LANE).astype(jnp.bfloat16)
    v3 = v.reshape(Bb, S, _LANE).astype(jnp.bfloat16)

    logits = jnp.einsum("bqd,bkd->bqk", q3, k3,
                        preferred_element_type=jnp.float32)       # (Bb, S, S)
    m = jnp.max(logits, axis=-1, keepdims=True)
    e = jnp.exp(logits - m)
    attn = e * pl.reciprocal(jnp.sum(e, axis=-1, keepdims=True), approx=True)

    o = jnp.einsum("bqk,bkd->bqd", attn.astype(jnp.bfloat16), v3,
                   preferred_element_type=jnp.float32)            # (Bb, S, 128)
    o2 = o.reshape(Bb * S, _LANE).astype(jnp.bfloat16)
    y2 = s2 + jnp.dot(o2, _wblk(w_ref, layout, "p_wo"),
                      preferred_element_type=jnp.float32)[:, :D]

    yn = _ln(y2, vp[10:11, :D], vp[11:12, :D]).astype(jnp.bfloat16)
    h = jnp.maximum(
        jnp.dot(yn, _wblk(w_ref, layout, "p_w1"),
                preferred_element_type=jnp.float32) + vp[12:13, :], 0.0)
    out2 = y2 + jnp.dot(
        h.astype(jnp.bfloat16), _wblk(w_ref, layout, "p_w2"),
        preferred_element_type=jnp.float32)[:, :D] + vp[13:14, :D]
    return out2.reshape(Bb, S, D)


# ------------------------------ fused kernel --------------------------------

def processor_kernel(x_ref, slots_ref, mask_ref, vec_ref, w_ref, out_ref, *,
                     layout):
    vp = vec_ref[...]                                   # (16, 128) packed vectors
    slots = slots_ref[...]
    D = slots.shape[-1]
    corrected, attn = _corrector(x_ref[...], slots, mask_ref[...], vp,
                                 w_ref, layout)
    predicted = _predictor(corrected, vp, w_ref, layout)
    # single lane-dense packed output block: corrected | predicted | attn
    out_ref[:, :, 0:D] = corrected
    out_ref[:, :, D:2 * D] = predicted
    out_ref[:, :, 2 * D:] = attn


def predictor_kernel(slots_ref, vec_ref, w_ref, out_ref, *, layout):
    # Used only on the inputs-is-None path of Processor.forward.
    out_ref[...] = _predictor(slots_ref[...], vec_ref[...], w_ref, layout)


# ------------------------------- wrappers -----------------------------------

def _grid_split(B):
    # Two fat grid steps: one half-batch per TensorCore on v7x; on v5e/v6e the
    # half-batch is still folded into matmul rows so per-step overhead is
    # amortized.  Falls back to a single step if B is odd / B == 1.
    return 2 if (B >= 2 and B % 2 == 0) else 1


def processor_call(inputs_flat, slots, padding_mask, vec, wslab, layout):
    B, N, C = inputs_flat.shape
    _, S, D = slots.shape
    R, L = vec.shape
    Wtot = 2 * D + N
    G = _grid_split(B)
    Bb = B // G

    kernel = functools.partial(processor_kernel, layout=layout)
    out = pl.pallas_call(
        kernel,
        out_shape=jax.ShapeDtypeStruct((B, S, Wtot), jnp.float32),
        grid=(G,),
        in_specs=[
            pl.BlockSpec((Bb, N, C), lambda g: (g, 0, 0)),
            pl.BlockSpec((Bb, S, D), lambda g: (g, 0, 0)),
            pl.BlockSpec((Bb, 1, N), lambda g: (g, 0, 0)),
            pl.BlockSpec((R, L), lambda g: (0, 0)),
            pl.BlockSpec(wslab.shape, lambda g: (0, 0)),
        ],
        out_specs=pl.BlockSpec((Bb, S, Wtot), lambda g: (g, 0, 0)),
        compiler_params=pltpu.CompilerParams(
            dimension_semantics=("parallel",)),
    )(inputs_flat, slots, padding_mask, vec, wslab)

    corrected = out[..., :D]
    predicted = out[..., D:2 * D]
    attn = out[..., 2 * D:]
    return corrected, predicted, attn


def predictor_only_call(slots, vec, wslab, layout):
    B, S, D = slots.shape
    R, L = vec.shape
    G = _grid_split(B)
    Bb = B // G
    kernel = functools.partial(predictor_kernel, layout=layout)
    return pl.pallas_call(
        kernel,
        out_shape=jax.ShapeDtypeStruct((B, S, D), jnp.float32),
        grid=(G,),
        in_specs=[
            pl.BlockSpec((Bb, S, D), lambda g: (g, 0, 0)),
            pl.BlockSpec((R, L), lambda g: (0, 0)),
            pl.BlockSpec(wslab.shape, lambda g: (0, 0)),
        ],
        out_specs=pl.BlockSpec((Bb, S, D), lambda g: (g, 0, 0)),
        compiler_params=pltpu.CompilerParams(
            dimension_semantics=("parallel",)),
    )(slots, vec, wslab)


def processor_forward(slots, inputs, padding_mask, vec, wslab, layout):
    """Mirrors Processor.forward(slots, inputs, padding_mask)."""
    if inputs is not None:
        B, H, W, C = inputs.shape
        inputs_flat = inputs.reshape(B, H * W, C)        # == inputs.flatten(1, 2)
        if padding_mask is None:
            padding_mask = jnp.ones((B, 1, H * W), jnp.float32)
        return processor_call(inputs_flat, slots, padding_mask, vec, wslab,
                              layout)
    # TODO(synk): the reference module leaves `attn` unbound on this path; we
    # return None instead of raising.
    corrected_slots = slots
    predicted_slots = predictor_only_call(slots, vec, wslab, layout)
    return corrected_slots, predicted_slots, None


# ----------------------------- param init -----------------------------------

def init_params(key, C, D, Hm=None, Hf=None):
    """Returns (vec_slab, weight_slab, layout).

    vec_slab   : (16, 128) f32 — all LN gammas/betas and MLP biases.
    weight_slab: (rows, 128) bf16 — every projection / MLP matrix embedded
                 top-left in a 128-lane-wide, sublane-aligned row block.
                 Matrices whose inputs arrive as 128-lane activations
                 (c_w2, p_wo, p_w2) are padded to 128 rows so the kernel never
                 lane-slices an activation at a non-zero offset.
    layout     : name -> (row_offset, n_rows) static dict for the kernel.
    """
    Hm = Hm if Hm is not None else 2 * D
    Hf = Hf if Hf is not None else 4 * D
    assert max(C, D, Hm, Hf) <= _LANE, "demo packing assumes feature dims <= 128"
    keys = jax.random.split(key, 11)

    def w(k, shape):
        return jax.random.normal(k, shape, jnp.float32) * (shape[0] ** -0.5)

    # ---- packed vector slab ----
    rows = [
        jnp.ones((C,), jnp.float32), jnp.zeros((C,), jnp.float32),   # corr LN(in)
        jnp.ones((D,), jnp.float32), jnp.zeros((D,), jnp.float32),   # corr LN(slots)
        jnp.ones((D,), jnp.float32), jnp.zeros((D,), jnp.float32),   # corr LN(update)
        jnp.zeros((Hm,), jnp.float32), jnp.zeros((D,), jnp.float32),  # corr MLP b1,b2
        jnp.ones((D,), jnp.float32), jnp.zeros((D,), jnp.float32),   # pred LN1
        jnp.ones((D,), jnp.float32), jnp.zeros((D,), jnp.float32),   # pred LN2
        jnp.zeros((Hf,), jnp.float32), jnp.zeros((D,), jnp.float32),  # pred MLP b1,b2
    ]
    vec = jnp.zeros((16, _LANE), jnp.float32)
    for r, vals in enumerate(rows):
        vec = vec.at[r, :vals.shape[0]].set(vals)

    # ---- packed weight slab (query scale folded into Wq) ----
    scale = D ** -0.5
    raw = {
        "c_wq": w(keys[0], (D, D)) * scale,
        "c_wk": w(keys[1], (C, D)),
        "c_wv": w(keys[2], (C, D)),
        "c_w1": w(keys[3], (D, Hm)),
        "c_w2": w(keys[4], (Hm, D)),
        "p_wq": w(keys[5], (D, D)) * scale,
        "p_wk": w(keys[6], (D, D)),
        "p_wv": w(keys[7], (D, D)),
        "p_wo": w(keys[8], (D, D)),
        "p_w1": w(keys[9], (D, Hf)),
        "p_w2": w(keys[10], (Hf, D)),
    }
    pad_rows_to_full = {"c_w2", "p_wo", "p_w2"}   # consume 128-lane activations

    layout = {}
    blocks = []
    off = 0
    for name, mat in raw.items():
        nrows = _LANE if name in pad_rows_to_full else mat.shape[0]
        nrows = -(-nrows // 8) * 8                 # sublane align
        blk = jnp.zeros((nrows, _LANE), jnp.float32)
        blk = blk.at[:mat.shape[0], :mat.shape[1]].set(mat)
        blocks.append(blk)
        layout[name] = (off, nrows)
        off += nrows
    wslab = jnp.concatenate(blocks, axis=0).astype(jnp.bfloat16)
    return vec, wslab, layout


# --------------------------------- main --------------------------------------

if __name__ == "__main__":
    B, H, W, C = 2, 8, 8, 32     # inputs  [B, H, W, C] (channels-last)
    S, D = 8, 32                 # slots   [B, S, D]
    N = H * W

    key = jax.random.PRNGKey(0)
    k_in, k_sl, k_p = jax.random.split(key, 3)

    inputs = jax.random.normal(k_in, (B, H, W, C), jnp.float32)
    slots = jax.random.normal(k_sl, (B, S, D), jnp.float32)
    padding_mask = jnp.ones((B, 1, N), jnp.float32)

    vec, wslab, layout = init_params(k_p, C, D)

    # main path: corrector + predictor fused
    corrected, predicted, attn = processor_forward(
        slots, inputs, padding_mask, vec, wslab, layout)
    jax.block_until_ready((corrected, predicted, attn))

    assert corrected.shape == (B, S, D)
    assert predicted.shape == (B, S, D)
    assert attn.shape == (B, S, N)
    assert bool(jnp.all(jnp.isfinite(corrected)))
    assert bool(jnp.all(jnp.isfinite(predicted)))
    assert bool(jnp.all(jnp.isfinite(attn)))

    # inputs-is-None path: predictor only
    c2, p2, a2 = processor_forward(slots, None, None, vec, wslab, layout)
    jax.block_until_ready(p2)
    assert p2.shape == (B, S, D) and a2 is None
    assert bool(jnp.all(jnp.isfinite(p2)))

    print("KERNEL_OK")
</pallas_src>

<mosaic_0001>
module attributes {stable_mosaic.version = 11 : i64} {
  func.func @processor_kernel(%arg0: i32, %arg1: memref<1x64x32xf32, #tpu.memory_space<vmem>>, %arg2: memref<1x8x32xf32, #tpu.memory_space<vmem>>, %arg3: memref<1x1x64xf32, #tpu.memory_space<vmem>>, %arg4: memref<16x128xf32, #tpu.memory_space<vmem>>, %arg5: memref<640x128xbf16, #tpu.memory_space<vmem>>, %arg6: memref<1x8x128xf32, #tpu.memory_space<vmem>>) attributes {dimension_semantics = [#tpu.dimension_semantics<parallel>], iteration_bounds = array<i64: 2>, scalar_prefetch = 0 : i64, scratch_operands = 0 : i64, tpu.core_type = #tpu.core_type<tc>, window_params = [{transform_indices = @transform_0, window_bounds = array<i64: 1, 64, 32>}, {transform_indices = @transform_1, window_bounds = array<i64: 1, 8, 32>}, {transform_indices = @transform_2, window_bounds = array<i64: 1, 1, 64>}, {pipeline_mode = #tpu.pipeline_mode<synchronous>, transform_indices = @transform_3, window_bounds = array<i64: 16, 128>}, {pipeline_mode = #tpu.pipeline_mode<synchronous>, transform_indices = @transform_4, window_bounds = array<i64: 640, 128>}, {transform_indices = @transform_5, window_bounds = array<i64: 1, 8, 128>}]} {
    %c0 = arith.constant 0 : index
    %c0_0 = arith.constant 0 : index
    %0 = vector.load %arg4[%c0, %c0_0] : memref<16x128xf32, #tpu.memory_space<vmem>>, vector<16x128xf32>
    %c0_1 = arith.constant 0 : index
    %c0_2 = arith.constant 0 : index
    %c0_3 = arith.constant 0 : index
    %1 = vector.load %arg2[%c0_1, %c0_2, %c0_3] : memref<1x8x32xf32, #tpu.memory_space<vmem>>, vector<1x8x32xf32>
    %c0_4 = arith.constant 0 : index
    %c0_5 = arith.constant 0 : index
    %c0_6 = arith.constant 0 : index
    %2 = vector.load %arg1[%c0_4, %c0_5, %c0_6] : memref<1x64x32xf32, #tpu.memory_space<vmem>>, vector<1x64x32xf32>
    %c0_7 = arith.constant 0 : index
    %c0_8 = arith.constant 0 : index
    %c0_9 = arith.constant 0 : index
    %3 = vector.load %arg3[%c0_7, %c0_8, %c0_9] : memref<1x1x64xf32, #tpu.memory_space<vmem>>, vector<1x1x64xf32>
    %4 = vector.shape_cast %2 : vector<1x64x32xf32> to vector<64x32xf32>
    %5 = vector.shape_cast %1 : vector<1x8x32xf32> to vector<8x32xf32>
    %6 = vector.extract_strided_slice %0 {offsets = [0, 0], sizes = [1, 32], strides = [1, 1]} : vector<16x128xf32> to vector<1x32xf32>
    %7 = vector.extract_strided_slice %0 {offsets = [1, 0], sizes = [1, 32], strides = [1, 1]} : vector<16x128xf32> to vector<1x32xf32>
    %cst = arith.constant dense<0.000000e+00> : vector<64xf32>
    %8 = vector.multi_reduction <add>, %4, %cst [1] : vector<64x32xf32> to vector<64xf32>
    %9 = vector.shape_cast %8 : vector<64xf32> to vector<64x1xf32>
    %cst_10 = arith.constant 3.200000e+01 : f32
    %10 = vector.broadcast %cst_10 : f32 to vector<64x1xf32>
    %11 = arith.divf %9, %10 : vector<64x1xf32>
    %12 = vector.broadcast %11 : vector<64x1xf32> to vector<64x32xf32>
    %13 = arith.subf %4, %12 : vector<64x32xf32>
    %14 = arith.mulf %13, %13 : vector<64x32xf32>
    %cst_11 = arith.constant dense<0.000000e+00> : vector<64xf32>
    %15 = vector.multi_reduction <add>, %14, %cst_11 [1] : vector<64x32xf32> to vector<64xf32>
    %16 = vector.shape_cast %15 : vector<64xf32> to vector<64x1xf32>
    %cst_12 = arith.constant 3.200000e+01 : f32
    %17 = vector.broadcast %cst_12 : f32 to vector<64x1xf32>
    %18 = arith.divf %16, %17 : vector<64x1xf32>
    %19 = vector.broadcast %11 : vector<64x1xf32> to vector<64x32xf32>
    %20 = arith.subf %4, %19 : vector<64x32xf32>
    %cst_13 = arith.constant 9.99999997E-7 : f32
    %21 = vector.broadcast %cst_13 : f32 to vector<64x1xf32>
    %22 = arith.addf %18, %21 : vector<64x1xf32>
    %23 = math.rsqrt %22 : vector<64x1xf32>
    %24 = vector.broadcast %23 : vector<64x1xf32> to vector<64x32xf32>
    %25 = arith.mulf %20, %24 : vector<64x32xf32>
    %26 = vector.broadcast %6 : vector<1x32xf32> to vector<64x32xf32>
    %27 = arith.mulf %25, %26 : vector<64x32xf32>
    %28 = vector.broadcast %7 : vector<1x32xf32> to vector<64x32xf32>
    %29 = arith.addf %27, %28 : vector<64x32xf32>
    %30 = arith.truncf %29 : vector<64x32xf32> to vector<64x32xbf16>
    %31 = vector.extract_strided_slice %0 {offsets = [2, 0], sizes = [1, 32], strides = [1, 1]} : vector<16x128xf32> to vector<1x32xf32>
    %32 = vector.extract_strided_slice %0 {offsets = [3, 0], sizes = [1, 32], strides = [1, 1]} : vector<16x128xf32> to vector<1x32xf32>
    %cst_14 = arith.constant dense<0.000000e+00> : vector<8xf32>
    %33 = vector.multi_reduction <add>, %5, %cst_14 [1] : vector<8x32xf32> to vector<8xf32>
    %34 = vector.shape_cast %33 : vector<8xf32> to vector<8x1xf32>
    %cst_15 = arith.constant 3.200000e+01 : f32
    %35 = vector.broadcast %cst_15 : f32 to vector<8x1xf32>
    %36 = arith.divf %34, %35 : vector<8x1xf32>
    %37 = vector.broadcast %36 : vector<8x1xf32> to vector<8x32xf32>
    %38 = arith.subf %5, %37 : vector<8x32xf32>
    %39 = arith.mulf %38, %38 : vector<8x32xf32>
    %cst_16 = arith.constant dense<0.000000e+00> : vector<8xf32>
    %40 = vector.multi_reduction <add>, %39, %cst_16 [1] : vector<8x32xf32> to vector<8xf32>
    %41 = vector.shape_cast %40 : vector<8xf32> to vector<8x1xf32>
    %cst_17 = arith.constant 3.200000e+01 : f32
    %42 = vector.broadcast %cst_17 : f32 to vector<8x1xf32>
    %43 = arith.divf %41, %42 : vector<8x1xf32>
    %44 = vector.broadcast %36 : vector<8x1xf32> to vector<8x32xf32>
    %45 = arith.subf %5, %44 : vector<8x32xf32>
    %cst_18 = arith.constant 9.99999997E-7 : f32
    %46 = vector.broadcast %cst_18 : f32 to vector<8x1xf32>
    %47 = arith.addf %43, %46 : vector<8x1xf32>
    %48 = math.rsqrt %47 : vector<8x1xf32>
    %49 = vector.broadcast %48 : vector<8x1xf32> to vector<8x32xf32>
    %50 = arith.mulf %45, %49 : vector<8x32xf32>
    %51 = vector.broadcast %31 : vector<1x32xf32> to vector<8x32xf32>
    %52 = arith.mulf %50, %51 : vector<8x32xf32>
    %53 = vector.broadcast %32 : vector<1x32xf32> to vector<8x32xf32>
    %54 = arith.addf %52, %53 : vector<8x32xf32>
    %55 = arith.truncf %54 : vector<8x32xf32> to vector<8x32xbf16>
    %c0_19 = arith.constant 0 : index
    %c0_20 = arith.constant 0 : index
    %56 = vector.load %arg5[%c0_19, %c0_20] : memref<640x128xbf16, #tpu.memory_space<vmem>>, vector<32x128xbf16>
    %cst_21 = arith.constant dense<0.000000e+00> : vector<8x128xf32>
    %57 = tpu.matmul %55, %56, %cst_21 {dimension_numbers = #tpu.dot_dimension_numbers<[1], [0], [0], [1], [0, 0, 1, 1], [], []>} : vector<8x32xbf16>, vector<32x128xbf16>, vector<8x128xf32> -> vector<8x128xf32>
    %c32 = arith.constant 32 : index
    %c0_22 = arith.constant 0 : index
    %58 = vector.load %arg5[%c32, %c0_22] : memref<640x128xbf16, #tpu.memory_space<vmem>>, vector<32x128xbf16>
    %cst_23 = arith.constant dense<0.000000e+00> : vector<64x128xf32>
    %59 = tpu.matmul %30, %58, %cst_23 {dimension_numbers = #tpu.dot_dimension_numbers<[1], [0], [0], [1], [0, 0, 1, 1], [], []>} : vector<64x32xbf16>, vector<32x128xbf16>, vector<64x128xf32> -> vector<64x128xf32>
    %c64 = arith.constant 64 : index
    %c0_24 = arith.constant 0 : index
    %60 = vector.load %arg5[%c64, %c0_24] : memref<640x128xbf16, #tpu.memory_space<vmem>>, vector<32x128xbf16>
    %cst_25 = arith.constant dense<0.000000e+00> : vector<64x128xf32>
    %61 = tpu.matmul %30, %60, %cst_25 {dimension_numbers = #tpu.dot_dimension_numbers<[1], [0], [0], [1], [0, 0, 1, 1], [], []>} : vector<64x32xbf16>, vector<32x128xbf16>, vector<64x128xf32> -> vector<64x128xf32>
    %62 = vector.shape_cast %57 : vector<8x128xf32> to vector<1x8x128xf32>
    %63 = arith.truncf %62 : vector<1x8x128xf32> to vector<1x8x128xbf16>
    %64 = vector.shape_cast %59 : vector<64x128xf32> to vector<1x64x128xf32>
    %65 = arith.truncf %64 : vector<1x64x128xf32> to vector<1x64x128xbf16>
    %66 = vector.shape_cast %61 : vector<64x128xf32> to vector<1x64x128xf32>
    %67 = arith.truncf %66 : vector<1x64x128xf32> to vector<1x64x128xbf16>
    "tpu.trace_start"() <{level = 10 : i32, message = "bsd,bnd->bsn"}> : () -> ()
    %cst_26 = arith.constant dense<0.000000e+00> : vector<1x8x64xf32>
    %68 = tpu.matmul %63, %65, %cst_26 {dimension_numbers = #tpu.dot_dimension_numbers<[2], [2], [1], [1], [0, 0, 0, 1, 1, 1], [0], [0]>} : vector<1x8x128xbf16>, vector<1x64x128xbf16>, vector<1x8x64xf32> -> vector<1x8x64xf32>
    "tpu.trace_stop"() : () -> ()
    %cst_27 = arith.constant dense<0xFF800000> : vector<1x64xf32>
    %69 = vector.multi_reduction <maximumf>, %68, %cst_27 [1] : vector<1x8x64xf32> to vector<1x64xf32>
    %70 = vector.shape_cast %69 : vector<1x64xf32> to vector<1x1x64xf32>
    %71 = vector.broadcast %70 : vector<1x1x64xf32> to vector<1x8x64xf32>
    %72 = arith.subf %68, %71 : vector<1x8x64xf32>
    %73 = math.exp %72 : vector<1x8x64xf32>
    %cst_28 = arith.constant dense<0.000000e+00> : vector<1x64xf32>
    %74 = vector.multi_reduction <add>, %73, %cst_28 [1] : vector<1x8x64xf32> to vector<1x64xf32>
    %75 = vector.shape_cast %74 : vector<1x64xf32> to vector<1x1x64xf32>
    %76 = tpu.reciprocal %75 {approx = true} : vector<1x1x64xf32> -> vector<1x1x64xf32>
    %77 = vector.broadcast %76 : vector<1x1x64xf32> to vector<1x8x64xf32>
    %78 = arith.mulf %73, %77 : vector<1x8x64xf32>
    %79 = vector.broadcast %3 : vector<1x1x64xf32> to vector<1x8x64xf32>
    %80 = arith.mulf %78, %79 : vector<1x8x64xf32>
    %cst_29 = arith.constant dense<0.000000e+00> : vector<1x8xf32>
    %81 = vector.multi_reduction <add>, %80, %cst_29 [2] : vector<1x8x64xf32> to vector<1x8xf32>
    %82 = vector.shape_cast %81 : vector<1x8xf32> to vector<1x8x1xf32>
    %cst_30 = arith.constant 9.99999993E-9 : f32
    %83 = vector.broadcast %cst_30 : f32 to vector<1x8x1xf32>
    %84 = arith.addf %82, %83 : vector<1x8x1xf32>
    %85 = tpu.reciprocal %84 {approx = true} : vector<1x8x1xf32> -> vector<1x8x1xf32>
    %86 = vector.broadcast %85 : vector<1x8x1xf32> to vector<1x8x64xf32>
    %87 = arith.mulf %80, %86 : vector<1x8x64xf32>
    %88 = arith.truncf %87 : vector<1x8x64xf32> to vector<1x8x64xbf16>
    "tpu.trace_start"() <{level = 10 : i32, message = "bsn,bnd->bsd"}> : () -> ()
    %cst_31 = arith.constant dense<0.000000e+00> : vector<1x8x128xf32>
    %89 = tpu.matmul %88, %67, %cst_31 {dimension_numbers = #tpu.dot_dimension_numbers<[2], [1], [1], [2], [0, 0, 0, 1, 1, 2], [0], [0]>} : vector<1x8x64xbf16>, vector<1x64x128xbf16>, vector<1x8x128xf32> -> vector<1x8x128xf32>
    "tpu.trace_stop"() : () -> ()
    %90 = vector.shape_cast %89 : vector<1x8x128xf32> to vector<8x128xf32>
    %91 = vector.extract_strided_slice %90 {offsets = [0, 0], sizes = [8, 32], strides = [1, 1]} : vector<8x128xf32> to vector<8x32xf32>
    %92 = arith.addf %5, %91 : vector<8x32xf32>
    %93 = vector.extract_strided_slice %0 {offsets = [4, 0], sizes = [1, 32], strides = [1, 1]} : vector<16x128xf32> to vector<1x32xf32>
    %94 = vector.extract_strided_slice %0 {offsets = [5, 0], sizes = [1, 32], strides = [1, 1]} : vector<16x128xf32> to vector<1x32xf32>
    %cst_32 = arith.constant dense<0.000000e+00> : vector<8xf32>
    %95 = vector.multi_reduction <add>, %92, %cst_32 [1] : vector<8x32xf32> to vector<8xf32>
    %96 = vector.shape_cast %95 : vector<8xf32> to vector<8x1xf32>
    %cst_33 = arith.constant 3.200000e+01 : f32
    %97 = vector.broadcast %cst_33 : f32 to vector<8x1xf32>
    %98 = arith.divf %96, %97 : vector<8x1xf32>
    %99 = vector.broadcast %98 : vector<8x1xf32> to vector<8x32xf32>
    %100 = arith.subf %92, %99 : vector<8x32xf32>
    %101 = arith.mulf %100, %100 : vector<8x32xf32>
    %cst_34 = arith.constant dense<0.000000e+00> : vector<8xf32>
    %102 = vector.multi_reduction <add>, %101, %cst_34 [1] : vector<8x32xf32> to vector<8xf32>
    %103 = vector.shape_cast %102 : vector<8xf32> to vector<8x1xf32>
    %cst_35 = arith.constant 3.200000e+01 : f32
    %104 = vector.broadcast %cst_35 : f32 to vector<8x1xf32>
    %105 = arith.divf %103, %104 : vector<8x1xf32>
    %106 = vector.broadcast %98 : vector<8x1xf32> to vector<8x32xf32>
    %107 = arith.subf %92, %106 : vector<8x32xf32>
    %cst_36 = arith.constant 9.99999997E-7 : f32
    %108 = vector.broadcast %cst_36 : f32 to vector<8x1xf32>
    %109 = arith.addf %105, %108 : vector<8x1xf32>
    %110 = math.rsqrt %109 : vector<8x1xf32>
    %111 = vector.broadcast %110 : vector<8x1xf32> to vector<8x32xf32>
    %112 = arith.mulf %107, %111 : vector<8x32xf32>
    %113 = vector.broadcast %93 : vector<1x32xf32> to vector<8x32xf32>
    %114 = arith.mulf %112, %113 : vector<8x32xf32>
    %115 = vector.broadcast %94 : vector<1x32xf32> to vector<8x32xf32>
    %116 = arith.addf %114, %115 : vector<8x32xf32>
    %117 = arith.truncf %116 : vector<8x32xf32> to vector<8x32xbf16>
    %c96 = arith.constant 96 : index
    %c0_37 = arith.constant 0 : index
    %118 = vector.load %arg5[%c96, %c0_37] : memref<640x128xbf16, #tpu.memory_space<vmem>>, vector<32x128xbf16>
    %cst_38 = arith.constant dense<0.000000e+00> : vector<8x128xf32>
    %119 = tpu.matmul %117, %118, %cst_38 {dimension_numbers = #tpu.dot_dimension_numbers<[1], [0], [0], [1], [0, 0, 1, 1], [], []>} : vector<8x32xbf16>, vector<32x128xbf16>, vector<8x128xf32> -> vector<8x128xf32>
    %120 = vector.extract_strided_slice %0 {offsets = [6, 0], sizes = [1, 128], strides = [1, 1]} : vector<16x128xf32> to vector<1x128xf32>
    %121 = vector.broadcast %120 : vector<1x128xf32> to vector<8x128xf32>
    %122 = arith.addf %119, %121 : vector<8x128xf32>
    %cst_39 = arith.constant 0.000000e+00 : f32
    %123 = vector.broadcast %cst_39 : f32 to vector<8x128xf32>
    %124 = arith.maximumf %122, %123 : vector<8x128xf32>
    %125 = arith.truncf %124 : vector<8x128xf32> to vector<8x128xbf16>
    %c128 = arith.constant 128 : index
    %c0_40 = arith.constant 0 : index
    %126 = vector.load %arg5[%c128, %c0_40] : memref<640x128xbf16, #tpu.memory_space<vmem>>, vector<128x128xbf16>
    %cst_41 = arith.constant dense<0.000000e+00> : vector<8x128xf32>
    %127 = tpu.matmul %125, %126, %cst_41 {dimension_numbers = #tpu.dot_dimension_numbers<[1], [0], [0], [1], [0, 0, 1, 1], [], []>} : vector<8x128xbf16>, vector<128x128xbf16>, vector<8x128xf32> -> vector<8x128xf32>
    %128 = vector.extract_strided_slice %127 {offsets = [0, 0], sizes = [8, 32], strides = [1, 1]} : vector<8x128xf32> to vector<8x32xf32>
    %129 = arith.addf %92, %128 : vector<8x32xf32>
    %130 = vector.extract_strided_slice %0 {offsets = [7, 0], sizes = [1, 32], strides = [1, 1]} : vector<16x128xf32> to vector<1x32xf32>
    %131 = vector.broadcast %130 : vector<1x32xf32> to vector<8x32xf32>
    %132 = arith.addf %129, %131 : vector<8x32xf32>
    %133 = vector.shape_cast %132 : vector<8x32xf32> to vector<1x8x32xf32>
    %134 = vector.shape_cast %133 : vector<1x8x32xf32> to vector<8x32xf32>
    %135 = vector.extract_strided_slice %0 {offsets = [8, 0], sizes = [1, 32], strides = [1, 1]} : vector<16x128xf32> to vector<1x32xf32>
    %136 = vector.extract_strided_slice %0 {offsets = [9, 0], sizes = [1, 32], strides = [1, 1]} : vector<16x128xf32> to vector<1x32xf32>
    %cst_42 = arith.constant dense<0.000000e+00> : vector<8xf32>
    %137 = vector.multi_reduction <add>, %134, %cst_42 [1] : vector<8x32xf32> to vector<8xf32>
    %138 = vector.shape_cast %137 : vector<8xf32> to vector<8x1xf32>
    %cst_43 = arith.constant 3.200000e+01 : f32
    %139 = vector.broadcast %cst_43 : f32 to vector<8x1xf32>
    %140 = arith.divf %138, %139 : vector<8x1xf32>
    %141 = vector.broadcast %140 : vector<8x1xf32> to vector<8x32xf32>
    %142 = arith.subf %134, %141 : vector<8x32xf32>
    %143 = arith.mulf %142, %142 : vector<8x32xf32>
    %cst_44 = arith.constant dense<0.000000e+00> : vector<8xf32>
    %144 = vector.multi_reduction <add>, %143, %cst_44 [1] : vector<8x32xf32> to vector<8xf32>
    %145 = vector.shape_cast %144 : vector<8xf32> to vector<8x1xf32>
    %cst_45 = arith.constant 3.200000e+01 : f32
    %146 = vector.broadcast %cst_45 : f32 to vector<8x1xf32>
    %147 = arith.divf %145, %146 : vector<8x1xf32>
    %148 = vector.broadcast %140 : vector<8x1xf32> to vector<8x32xf32>
    %149 = arith.subf %134, %148 : vector<8x32xf32>
    %cst_46 = arith.constant 9.99999997E-7 : f32
    %150 = vector.broadcast %cst_46 : f32 to vector<8x1xf32>
    %151 = arith.addf %147, %150 : vector<8x1xf32>
    %152 = math.rsqrt %151 : vector<8x1xf32>
    %153 = vector.broadcast %152 : vector<8x1xf32> to vector<8x32xf32>
    %154 = arith.mulf %149, %153 : vector<8x32xf32>
    %155 = vector.broadcast %135 : vector<1x32xf32> to vector<8x32xf32>
    %156 = arith.mulf %154, %155 : vector<8x32xf32>
    %157 = vector.broadcast %136 : vector<1x32xf32> to vector<8x32xf32>
    %158 = arith.addf %156, %157 : vector<8x32xf32>
    %159 = arith.truncf %158 : vector<8x32xf32> to vector<8x32xbf16>
    %c256 = arith.constant 256 : index
    %c0_47 = arith.constant 0 : index
    %160 = vector.load %arg5[%c256, %c0_47] : memref<640x128xbf16, #tpu.memory_space<vmem>>, vector<32x128xbf16>
    %cst_48 = arith.constant dense<0.000000e+00> : vector<8x128xf32>
    %161 = tpu.matmul %159, %160, %cst_48 {dimension_numbers = #tpu.dot_dimension_numbers<[1], [0], [0], [1], [0, 0, 1, 1], [], []>} : vector<8x32xbf16>, vector<32x128xbf16>, vector<8x128xf32> -> vector<8x128xf32>
    %c288 = arith.constant 288 : index
    %c0_49 = arith.constant 0 : index
    %162 = vector.load %arg5[%c288, %c0_49] : memref<640x128xbf16, #tpu.memory_space<vmem>>, vector<32x128xbf16>
    %cst_50 = arith.constant dense<0.000000e+00> : vector<8x128xf32>
    %163 = tpu.matmul %159, %162, %cst_50 {dimension_numbers = #tpu.dot_dimension_numbers<[1], [0], [0], [1], [0, 0, 1, 1], [], []>} : vector<8x32xbf16>, vector<32x128xbf16>, vector<8x128xf32> -> vector<8x128xf32>
    %c320 = arith.constant 320 : index
    %c0_51 = arith.constant 0 : index
    %164 = vector.load %arg5[%c320, %c0_51] : memref<640x128xbf16, #tpu.memory_space<vmem>>, vector<32x128xbf16>
    %cst_52 = arith.constant dense<0.000000e+00> : vector<8x128xf32>
    %165 = tpu.matmul %159, %164, %cst_52 {dimension_numbers = #tpu.dot_dimension_numbers<[1], [0], [0], [1], [0, 0, 1, 1], [], []>} : vector<8x32xbf16>, vector<32x128xbf16>, vector<8x128xf32> -> vector<8x128xf32>
    %166 = vector.shape_cast %161 : vector<8x128xf32> to vector<1x8x128xf32>
    %167 = arith.truncf %166 : vector<1x8x128xf32> to vector<1x8x128xbf16>
    %168 = vector.shape_cast %163 : vector<8x128xf32> to vector<1x8x128xf32>
    %169 = arith.truncf %168 : vector<1x8x128xf32> to vector<1x8x128xbf16>
    %170 = vector.shape_cast %165 : vector<8x128xf32> to vector<1x8x128xf32>
    %171 = arith.truncf %170 : vector<1x8x128xf32> to vector<1x8x128xbf16>
    "tpu.trace_start"() <{level = 10 : i32, message = "bqd,bkd->bqk"}> : () -> ()
    %cst_53 = arith.constant dense<0.000000e+00> : vector<1x8x8xf32>
    %172 = tpu.matmul %167, %169, %cst_53 {dimension_numbers = #tpu.dot_dimension_numbers<[2], [2], [1], [1], [0, 0, 0, 1, 1, 1], [0], [0]>} : vector<1x8x128xbf16>, vector<1x8x128xbf16>, vector<1x8x8xf32> -> vector<1x8x8xf32>
    "tpu.trace_stop"() : () -> ()
    %cst_54 = arith.constant dense<0xFF800000> : vector<1x8xf32>
    %173 = vector.multi_reduction <maximumf>, %172, %cst_54 [2] : vector<1x8x8xf32> to vector<1x8xf32>
    %174 = vector.shape_cast %173 : vector<1x8xf32> to vector<1x8x1xf32>
    %175 = vector.broadcast %174 : vector<1x8x1xf32> to vector<1x8x8xf32>
    %176 = arith.subf %172, %175 : vector<1x8x8xf32>
    %177 = math.exp %176 : vector<1x8x8xf32>
    %cst_55 = arith.constant dense<0.000000e+00> : vector<1x8xf32>
    %178 = vector.multi_reduction <add>, %177, %cst_55 [2] : vector<1x8x8xf32> to vector<1x8xf32>
    %179 = vector.shape_cast %178 : vector<1x8xf32> to vector<1x8x1xf32>
    %180 = tpu.reciprocal %179 {approx = true} : vector<1x8x1xf32> -> vector<1x8x1xf32>
    %181 = vector.broadcast %180 : vector<1x8x1xf32> to vector<1x8x8xf32>
    %182 = arith.mulf %177, %181 : vector<1x8x8xf32>
    %183 = arith.truncf %182 : vector<1x8x8xf32> to vector<1x8x8xbf16>
    "tpu.trace_start"() <{level = 10 : i32, message = "bqk,bkd->bqd"}> : () -> ()
    %cst_56 = arith.constant dense<0.000000e+00> : vector<1x8x128xf32>
    %184 = tpu.matmul %183, %171, %cst_56 {dimension_numbers = #tpu.dot_dimension_numbers<[2], [1], [1], [2], [0, 0, 0, 1, 1, 2], [0], [0]>} : vector<1x8x8xbf16>, vector<1x8x128xbf16>, vector<1x8x128xf32> -> vector<1x8x128xf32>
    "tpu.trace_stop"() : () -> ()
    %185 = vector.shape_cast %184 : vector<1x8x128xf32> to vector<8x128xf32>
    %186 = arith.truncf %185 : vector<8x128xf32> to vector<8x128xbf16>
    %c352 = arith.constant 352 : index
    %c0_57 = arith.constant 0 : index
    %187 = vector.load %arg5[%c352, %c0_57] : memref<640x128xbf16, #tpu.memory_space<vmem>>, vector<128x128xbf16>
    %cst_58 = arith.constant dense<0.000000e+00> : vector<8x128xf32>
    %188 = tpu.matmul %186, %187, %cst_58 {dimension_numbers = #tpu.dot_dimension_numbers<[1], [0], [0], [1], [0, 0, 1, 1], [], []>} : vector<8x128xbf16>, vector<128x128xbf16>, vector<8x128xf32> -> vector<8x128xf32>
    %189 = vector.extract_strided_slice %188 {offsets = [0, 0], sizes = [8, 32], strides = [1, 1]} : vector<8x128xf32> to vector<8x32xf32>
    %190 = arith.addf %134, %189 : vector<8x32xf32>
    %191 = vector.extract_strided_slice %0 {offsets = [10, 0], sizes = [1, 32], strides = [1, 1]} : vector<16x128xf32> to vector<1x32xf32>
    %192 = vector.extract_strided_slice %0 {offsets = [11, 0], sizes = [1, 32], strides = [1, 1]} : vector<16x128xf32> to vector<1x32xf32>
    %cst_59 = arith.constant dense<0.000000e+00> : vector<8xf32>
    %193 = vector.multi_reduction <add>, %190, %cst_59 [1] : vector<8x32xf32> to vector<8xf32>
    %194 = vector.shape_cast %193 : vector<8xf32> to vector<8x1xf32>
    %cst_60 = arith.constant 3.200000e+01 : f32
    %195 = vector.broadcast %cst_60 : f32 to vector<8x1xf32>
    %196 = arith.divf %194, %195 : vector<8x1xf32>
    %197 = vector.broadcast %196 : vector<8x1xf32> to vector<8x32xf32>
    %198 = arith.subf %190, %197 : vector<8x32xf32>
    %199 = arith.mulf %198, %198 : vector<8x32xf32>
    %cst_61 = arith.constant dense<0.000000e+00> : vector<8xf32>
    %200 = vector.multi_reduction <add>, %199, %cst_61 [1] : vector<8x32xf32> to vector<8xf32>
    %201 = vector.shape_cast %200 : vector<8xf32> to vector<8x1xf32>
    %cst_62 = arith.constant 3.200000e+01 : f32
    %202 = vector.broadcast %cst_62 : f32 to vector<8x1xf32>
    %203 = arith.divf %201, %202 : vector<8x1xf32>
    %204 = vector.broadcast %196 : vector<8x1xf32> to vector<8x32xf32>
    %205 = arith.subf %190, %204 : vector<8x32xf32>
    %cst_63 = arith.constant 9.99999997E-7 : f32
    %206 = vector.broadcast %cst_63 : f32 to vector<8x1xf32>
    %207 = arith.addf %203, %206 : vector<8x1xf32>
    %208 = math.rsqrt %207 : vector<8x1xf32>
    %209 = vector.broadcast %208 : vector<8x1xf32> to vector<8x32xf32>
    %210 = arith.mulf %205, %209 : vector<8x32xf32>
    %211 = vector.broadcast %191 : vector<1x32xf32> to vector<8x32xf32>
    %212 = arith.mulf %210, %211 : vector<8x32xf32>
    %213 = vector.broadcast %192 : vector<1x32xf32> to vector<8x32xf32>
    %214 = arith.addf %212, %213 : vector<8x32xf32>
    %215 = arith.truncf %214 : vector<8x32xf32> to vector<8x32xbf16>
    %c480 = arith.constant 480 : index
    %c0_64 = arith.constant 0 : index
    %216 = vector.load %arg5[%c480, %c0_64] : memref<640x128xbf16, #tpu.memory_space<vmem>>, vector<32x128xbf16>
    %cst_65 = arith.constant dense<0.000000e+00> : vector<8x128xf32>
    %217 = tpu.matmul %215, %216, %cst_65 {dimension_numbers = #tpu.dot_dimension_numbers<[1], [0], [0], [1], [0, 0, 1, 1], [], []>} : vector<8x32xbf16>, vector<32x128xbf16>, vector<8x128xf32> -> vector<8x128xf32>
    %218 = vector.extract_strided_slice %0 {offsets = [12, 0], sizes = [1, 128], strides = [1, 1]} : vector<16x128xf32> to vector<1x128xf32>
    %219 = vector.broadcast %218 : vector<1x128xf32> to vector<8x128xf32>
    %220 = arith.addf %217, %219 : vector<8x128xf32>
    %cst_66 = arith.constant 0.000000e+00 : f32
    %221 = vector.broadcast %cst_66 : f32 to vector<8x128xf32>
    %222 = arith.maximumf %220, %221 : vector<8x128xf32>
    %223 = arith.truncf %222 : vector<8x128xf32> to vector<8x128xbf16>
    %c512 = arith.constant 512 : index
    %c0_67 = arith.constant 0 : index
    %224 = vector.load %arg5[%c512, %c0_67] : memref<640x128xbf16, #tpu.memory_space<vmem>>, vector<128x128xbf16>
    %cst_68 = arith.constant dense<0.000000e+00> : vector<8x128xf32>
    %225 = tpu.matmul %223, %224, %cst_68 {dimension_numbers = #tpu.dot_dimension_numbers<[1], [0], [0], [1], [0, 0, 1, 1], [], []>} : vector<8x128xbf16>, vector<128x128xbf16>, vector<8x128xf32> -> vector<8x128xf32>
    %226 = vector.extract_strided_slice %225 {offsets = [0, 0], sizes = [8, 32], strides = [1, 1]} : vector<8x128xf32> to vector<8x32xf32>
    %227 = arith.addf %190, %226 : vector<8x32xf32>
    %228 = vector.extract_strided_slice %0 {offsets = [13, 0], sizes = [1, 32], strides = [1, 1]} : vector<16x128xf32> to vector<1x32xf32>
    %229 = vector.broadcast %228 : vector<1x32xf32> to vector<8x32xf32>
    %230 = arith.addf %227, %229 : vector<8x32xf32>
    %231 = vector.shape_cast %230 : vector<8x32xf32> to vector<1x8x32xf32>
    %c0_69 = arith.constant 0 : index
    %c0_70 = arith.constant 0 : index
    %c0_71 = arith.constant 0 : index
    %232 = vector.load %arg6[%c0_69, %c0_70, %c0_71] : memref<1x8x128xf32, #tpu.memory_space<vmem>>, vector<1x8x32xf32>
    tpu.vector_store %arg6[%c0_69, %c0_70, %c0_71], %133 {strides = array<i32>} : memref<1x8x128xf32, #tpu.memory_space<vmem>>, vector<1x8x32xf32>,
    %c0_72 = arith.constant 0 : index
    %c0_73 = arith.constant 0 : index
    %c32_74 = arith.constant 32 : index
    %233 = vector.load %arg6[%c0_72, %c0_73, %c32_74] : memref<1x8x128xf32, #tpu.memory_space<vmem>>, vector<1x8x32xf32>
    tpu.vector_store %arg6[%c0_72, %c0_73, %c32_74], %231 {strides = array<i32>} : memref<1x8x128xf32, #tpu.memory_space<vmem>>, vector<1x8x32xf32>,
    %c0_75 = arith.constant 0 : index
    %c0_76 = arith.constant 0 : index
    %c64_77 = arith.constant 64 : index
    %234 = vector.load %arg6[%c0_75, %c0_76, %c64_77] : memref<1x8x128xf32, #tpu.memory_space<vmem>>, vector<1x8x64xf32>
    tpu.vector_store %arg6[%c0_75, %c0_76, %c64_77], %80 {strides = array<i32>} : memref<1x8x128xf32, #tpu.memory_space<vmem>>, vector<1x8x64xf32>,
    return
  }
  func.func @transform_0(%arg0: i32) -> (i32, i32, i32) {
    %c0_i32 = arith.constant 0 : i32
    %c0_i32_0 = arith.constant 0 : i32
    %c0_i32_1 = arith.constant 0 : i32
    return %arg0, %c0_i32, %c0_i32_0 : i32, i32, i32
  }
  func.func @transform_1(%arg0: i32) -> (i32, i32, i32) {
    %c0_i32 = arith.constant 0 : i32
    %c0_i32_0 = arith.constant 0 : i32
    %c0_i32_1 = arith.constant 0 : i32
    return %arg0, %c0_i32, %c0_i32_0 : i32, i32, i32
  }
  func.func @transform_2(%arg0: i32) -> (i32, i32, i32) {
    %c0_i32 = arith.constant 0 : i32
    %c0_i32_0 = arith.constant 0 : i32
    %c0_i32_1 = arith.constant 0 : i32
    return %arg0, %c0_i32, %c0_i32_0 : i32, i32, i32
  }
  func.func @transform_3(%arg0: i32) -> (i32, i32) {
    %c0_i32 = arith.constant 0 : i32
    %c0_i32_0 = arith.constant 0 : i32
    %c0_i32_1 = arith.constant 0 : i32
    return %c0_i32, %c0_i32_0 : i32, i32
  }
  func.func @transform_4(%arg0: i32) -> (i32, i32) {
    %c0_i32 = arith.constant 0 : i32
    %c0_i32_0 = arith.constant 0 : i32
    %c0_i32_1 = arith.constant 0 : i32
    return %c0_i32, %c0_i32_0 : i32, i32
  }
  func.func @transform_5(%arg0: i32) -> (i32, i32, i32) {
    %c0_i32 = arith.constant 0 : i32
    %c0_i32_0 = arith.constant 0 : i32
    %c0_i32_1 = arith.constant 0 : i32
    return %arg0, %c0_i32, %c0_i32_0 : i32, i32, i32
  }
}

</mosaic_0001>

<llo_original>
// kernel: tpu_custom_call.1
$region0: #{tpu_custom_call.1}
  #allocation0 [shape = 'u32[]', space=smem, size = 0x4, offset = 0x4, fixed_abs, tag = 'smem constant byte address 0x4 - core index']
  #allocation1 [shape = 'u32[144,128]{1,0:T(1,128)}', space=vmem, size = 0x12000, scoped, tag = 'internal scratch']
  %s0 = inlined_call_operand.vmem [shape: f32[2,64,32], index: 0, kind: input, shape index: {}]
  %s1 = inlined_call_operand.vmem [shape: f32[2,8,32], index: 1, kind: input, shape index: {}]
  %s2 = inlined_call_operand.vmem [shape: f32[2,1,64], index: 2, kind: input, shape index: {}]
  %s3 = inlined_call_operand.vmem [shape: f32[16,128], index: 3, kind: input, shape index: {}]
  %s4 = inlined_call_operand.hbm [shape: bf16[640,128], index: 4, kind: input, shape index: {}]
  %s5 = inlined_call_operand.hbm [shape: f32[2,8,128], index: 5, kind: output, shape index: {}]
  %s6 = sld [smem:[#allocation0]]
  $region57: #{tpu_custom_call.1} parent=0
    _
  %s8 = ssub.s32 1, %s6
  %s9 = scalar_select 0, %s8, %s6
  $region1: #{tpu_custom_call.1} parent=0
    #allocation2 [shape = 'u8[163840]{0}', space=vmem, size = 0x28000, scoped, tag = 'input window, operand 4, single buffered']
    #allocation3 [shape = 's32[2]{0}', space=sflag, size = 0x8, scoped, tag = 'scoped memory for tpu_custom_call.1']
    #allocation4 [shape = 's32[2]{0}', space=sflag, size = 0x8, scoped, tag = 'scoped memory for tpu_custom_call.1']
    #allocation5 [shape = 'u8[8192]{0}', space=vmem, size = 0x2000, scoped, tag = 'output window, operand 0']
    %10 = vsyncpa [#allocation3], 0
    %11 = vsyncpa [#allocation4], 0
    %s12 = scalar_lea.sflag [#allocation4], 1
    %13 = vsyncpa %s12, 0
    loop: start=0, step=1, limit=4
    $region2: #{tpu_custom_call.1} parent=1 // loop_pre_header
      _
    $region3: #{tpu_custom_call.1} parent=1 // loop_header
      %s15 = sphi 0, %s19
      %p16 = scmp.ge.s32.totalorder %s15, 4
      %s25 = sphi 0, %s27
      %s28 = sphi 0, %s25
      %s29 = sphi 0, %s28
      %s45 = sphi 0, %s29
      %s51 = sphi 0, %s53
      %s54 = sphi 0, %s51
      %s55 = sphi 0, %s54
      %s71 = sphi 0, %s55
      %s77 = sphi 0, %s79
      %s80 = sphi 0, %s77
      %s81 = sphi 0, %s80
      %s97 = sphi 0, %s81
      %s101 = sphi 0, %s101
      %s103 = sphi 0, %s101
      %s104 = sphi 0, %s103
      %s118 = sphi 0, %s104
      %s122 = sphi 0, %s122
      %s124 = sphi 0, %s122
      %s125 = sphi 0, %s124
      %s139 = sphi 0, %s125
      %s145 = sphi 0, %s147
      %s148 = sphi 0, %s145
      %s149 = sphi 0, %s148
      %s165 = sphi 0, %s149
    $region4: #{tpu_custom_call.1} parent=1 // loop_header_branch
      %18 = sbr.rel (%p16) target = $region8
    $region5: #{tpu_custom_call.1} parent=1 // loop_body
      %s20 = ssub.s32 %s15, 1
      %s21 = ssub.s32 %s15, 2
      %s22 = sadd.s32 %s15, 1
      %s23 = ssub.s32 %s15, %s22
      %p24 = scmp.eq.s32.totalorder %s23, 0
      %s26 = sadd.s32 %s25, 1
      %s27 = scalar_select %p24, %s25, %s26
      %p30 = pneg %p24
      %p31 = scmp.eq.s32.totalorder %s15, 1
      %p32 = por %p30, %p31
      %p33 = scmp.ne.s32.totalorder %s25, %s28
      %p34 = scmp.eq.s32.totalorder %s15, 0
      %p35 = por %p33, %p34
      %p36 = scmp.ne.s32.totalorder %s25, %s28
      %p37 = scmp.eq.s32.totalorder %s20, 1
      %p38 = por %p36, %p37
      %p39 = scmp.ne.s32.totalorder %s28, %s29
      %p40 = scmp.eq.s32.totalorder %s20, 0
      %p41 = por %p39, %p40
      %p42 = scmp.ne.s32.totalorder %s28, %s29
      %p43 = scmp.eq.s32.totalorder %s21, 1
      %p44 = por %p42, %p43
      %p46 = scmp.ne.s32.totalorder %s29, %s45
      %p47 = scmp.eq.s32.totalorder %s21, 0
      %p48 = por %p46, %p47
      %s49 = ssub.s32 %s15, %s22
      %p50 = scmp.eq.s32.totalorder %s49, 0
      %s52 = sadd.s32 %s51, 1
      %s53 = scalar_select %p50, %s51, %s52
      %p56 = pneg %p50
      %p57 = scmp.eq.s32.totalorder %s15, 1
      %p58 = por %p56, %p57
      %p59 = scmp.ne.s32.totalorder %s51, %s54
      %p60 = scmp.eq.s32.totalorder %s15, 0
      %p61 = por %p59, %p60
      %p62 = scmp.ne.s32.totalorder %s51, %s54
      %p63 = scmp.eq.s32.totalorder %s20, 1
      %p64 = por %p62, %p63
      %p65 = scmp.ne.s32.totalorder %s54, %s55
      %p66 = scmp.eq.s32.totalorder %s20, 0
      %p67 = por %p65, %p66
      %p68 = scmp.ne.s32.totalorder %s54, %s55
      %p69 = scmp.eq.s32.totalorder %s21, 1
      %p70 = por %p68, %p69
      %p72 = scmp.ne.s32.totalorder %s55, %s71
      %p73 = scmp.eq.s32.totalorder %s21, 0
      %p74 = por %p72, %p73
      %s75 = ssub.s32 %s15, %s22
      %p76 = scmp.eq.s32.totalorder %s75, 0
      %s78 = sadd.s32 %s77, 1
      %s79 = scalar_select %p76, %s77, %s78
      %p82 = pneg %p76
      %p83 = scmp.eq.s32.totalorder %s15, 1
      %p84 = por %p82, %p83
      %p85 = scmp.ne.s32.totalorder %s77, %s80
      %p86 = scmp.eq.s32.totalorder %s15, 0
      %p87 = por %p85, %p86
      %p88 = scmp.ne.s32.totalorder %s77, %s80
      %p89 = scmp.eq.s32.totalorder %s20, 1
      %p90 = por %p88, %p89
      %p91 = scmp.ne.s32.totalorder %s80, %s81
      %p92 = scmp.eq.s32.totalorder %s20, 0
      %p93 = por %p91, %p92
      %p94 = scmp.ne.s32.totalorder %s80, %s81
      %p95 = scmp.eq.s32.totalorder %s21, 1
      %p96 = por %p94, %p95
      %p98 = scmp.ne.s32.totalorder %s81, %s97
      %p99 = scmp.eq.s32.totalorder %s21, 0
      %p100 = por %p98, %p99
      %s102 = sadd.s32 %s101, 1
      %p105 = scmp.eq.s32.totalorder %s15, 1
      %p106 = scmp.ne.s32.totalorder %s101, %s103
      %p107 = scmp.eq.s32.totalorder %s15, 0
      %p108 = por %p106, %p107
      %p109 = scmp.ne.s32.totalorder %s101, %s103
      %p110 = scmp.eq.s32.totalorder %s20, 1
      %p111 = por %p109, %p110
      %p112 = scmp.ne.s32.totalorder %s103, %s104
      %p113 = scmp.eq.s32.totalorder %s20, 0
      %p114 = por %p112, %p113
      %p115 = scmp.ne.s32.totalorder %s103, %s104
      %p116 = scmp.eq.s32.totalorder %s21, 1
      %p117 = por %p115, %p116
      %p119 = scmp.ne.s32.totalorder %s104, %s118
      %p120 = scmp.eq.s32.totalorder %s21, 0
      %p121 = por %p119, %p120
      %s123 = sadd.s32 %s122, 1
      %p126 = scmp.eq.s32.totalorder %s15, 1
      %p127 = scmp.ne.s32.totalorder %s122, %s124
      %p128 = scmp.eq.s32.totalorder %s15, 0
      %p129 = por %p127, %p128
      %p130 = scmp.ne.s32.totalorder %s122, %s124
      %p131 = scmp.eq.s32.totalorder %s20, 1
      %p132 = por %p130, %p131
      %p133 = scmp.ne.s32.totalorder %s124, %s125
      %p134 = scmp.eq.s32.totalorder %s20, 0
      %p135 = por %p133, %p134
      %p136 = scmp.ne.s32.totalorder %s124, %s125
      %p137 = scmp.eq.s32.totalorder %s21, 1
      %p138 = por %p136, %p137
      %p140 = scmp.ne.s32.totalorder %s125, %s139
      %p141 = scmp.eq.s32.totalorder %s21, 0
      %p142 = por %p140, %p141
      %s143 = ssub.s32 %s15, %s22
      %p144 = scmp.eq.s32.totalorder %s143, 0
      %s146 = sadd.s32 %s145, 1
      %s147 = scalar_select %p144, %s145, %s146
      %p150 = pneg %p144
      %p151 = scmp.eq.s32.totalorder %s15, 1
      %p152 = por %p150, %p151
      %p153 = scmp.ne.s32.totalorder %s145, %s148
      %p154 = scmp.eq.s32.totalorder %s15, 0
      %p155 = por %p153, %p154
      %p156 = scmp.ne.s32.totalorder %s145, %s148
      %p157 = scmp.eq.s32.totalorder %s20, 1
      %p158 = por %p156, %p157
      %p159 = scmp.ne.s32.totalorder %s148, %s149
      %p160 = scmp.eq.s32.totalorder %s20, 0
      %p161 = por %p159, %p160
      %p162 = scmp.ne.s32.totalorder %s148, %s149
      %p163 = scmp.eq.s32.totalorder %s21, 1
      %p164 = por %p162, %p163
      %p166 = scmp.ne.s32.totalorder %s149, %s165
      %p167 = scmp.eq.s32.totalorder %s21, 0
      %p168 = por %p166, %p167
      %p169 = scmp.le.s32.totalorder 1, %s15
      %p170 = scmp.lt.s32.totalorder %s15, 3
      %p171 = pnand %p169, %p170
      %p172 = pneg %p171
      // Predicated region
      $region9: #{tpu_custom_call.1} parent=5 // pred_check
        _
      $region10: #{tpu_custom_call.1} parent=5 // pred_check_branch
        %174 = sbr.rel (%p171) target = $region12
      $region11: #{tpu_custom_call.1} parent=5 // pred_region
        %s175 = ssub.s32 %s15, 1
        // Predicated region
        $region13: #{tpu_custom_call.1} parent=11 // pred_check
          %p176 = pneg %p114
        $region14: #{tpu_custom_call.1} parent=11 // pred_check_branch
          %178 = sbr.rel (%p176) target = $region16
        $region15: #{tpu_custom_call.1} parent=11 // pred_region
          _
        $region16: #{tpu_custom_call.1} parent=11 // pred_fallthru
          _
        // Predicated region
        $region17: #{tpu_custom_call.1} parent=11 // pred_check
          %p179 = pneg %p135
        $region18: #{tpu_custom_call.1} parent=11 // pred_check_branch
          %181 = sbr.rel (%p179) target = $region20
        $region19: #{tpu_custom_call.1} parent=11 // pred_region
          %s183 = ssub.s32 5120, 5120
          %184 = vsyncadd [#allocation3], %s183
          %s185 = sshll.u32 [#allocation2], 4
          %s186 = int_to_ptr.vmem [resolvable:$true] %s185
          %191 = dma.hbm_to_vmem [thread:$0]  %s4, 5120, %s186, [#allocation3], 64, 64, 4
        $region20: #{tpu_custom_call.1} parent=11 // pred_fallthru
          _
      $region12: #{tpu_custom_call.1} parent=5 // pred_fallthru
        _
      %p192 = scmp.lt.s32.totalorder %s15, 2
      // Predicated region
      $region21: #{tpu_custom_call.1} parent=5 // pred_check
        %p193 = pneg %p192
      $region22: #{tpu_custom_call.1} parent=5 // pred_check_branch
        %195 = sbr.rel (%p193) target = $region24
      $region23: #{tpu_custom_call.1} parent=5 // pred_region
        // Predicated region
        $region25: #{tpu_custom_call.1} parent=23 // pred_check
          %p196 = pneg %p35
        $region26: #{tpu_custom_call.1} parent=23 // pred_check_branch
          %198 = sbr.rel (%p196) target = $region28
        $region27: #{tpu_custom_call.1} parent=23 // pred_region
          %p199 = scmp.lt.s32.totalorder %s15, 1
          %s200 = scalar_select %p199, %s15, 1
          %s201 = smul.addr %s200, 8
          %s202 = smul.addr %s201, 8
          %s203 = scalar_lea.vmem %s0, %s202
        $region28: #{tpu_custom_call.1} parent=23 // pred_fallthru
          _
        // Predicated region
        $region29: #{tpu_custom_call.1} parent=23 // pred_check
          %p204 = pneg %p61
        $region30: #{tpu_custom_call.1} parent=23 // pred_check_branch
          %206 = sbr.rel (%p204) target = $region32
        $region31: #{tpu_custom_call.1} parent=23 // pred_region
          %p207 = scmp.lt.s32.totalorder %s15, 1
          %s208 = scalar_select %p207, %s15, 1
          %s209 = smul.addr %s208, 8
          %s210 = scalar_lea.vmem %s1, %s209
        $region32: #{tpu_custom_call.1} parent=23 // pred_fallthru
          _
        // Predicated region
        $region33: #{tpu_custom_call.1} parent=23 // pred_check
          %p211 = pneg %p87
        $region34: #{tpu_custom_call.1} parent=23 // pred_check_branch
          %213 = sbr.rel (%p211) target = $region36
        $region35: #{tpu_custom_call.1} parent=23 // pred_region
          %p214 = scmp.lt.s32.totalorder %s15, 1
          %s215 = scalar_select %p214, %s15, 1
          %s216 = scalar_lea.vmem %s2, %s215
        $region36: #{tpu_custom_call.1} parent=23 // pred_fallthru
          _
      $region24: #{tpu_custom_call.1} parent=5 // pred_fallthru
        _
      %p217 = scmp.le.s32.totalorder 1, %s15
      %p218 = scmp.lt.s32.totalorder %s15, 3
      %p219 = pnand %p217, %p218
      %p220 = pneg %p219
      // Predicated region
      $region37: #{tpu_custom_call.1} parent=5 // pred_check
        _
      $region38: #{tpu_custom_call.1} parent=5 // pred_check_branch
        %222 = sbr.rel (%p219) target = $region40
      $region39: #{tpu_custom_call.1} parent=5 // pred_region
        %s223 = ssub.s32 %s15, 1
        // Predicated region
        $region41: #{tpu_custom_call.1} parent=39 // pred_check
          %p224 = pneg %p135
        $region42: #{tpu_custom_call.1} parent=39 // pred_check_branch
          %226 = sbr.rel (%p224) target = $region44
        $region43: #{tpu_custom_call.1} parent=39 // pred_region
          %227 = dma.done [#allocation3], 5120
        $region44: #{tpu_custom_call.1} parent=39 // pred_fallthru
          _
        %p228 = scmp.lt.s32.totalorder %s20, 1
        %s229 = scalar_select %p228, %s20, 1
        %s230 = smul.addr %s229, 8
        %s231 = smul.addr %s230, 8
        %s232 = scalar_lea.vmem %s0, %s231
        %p233 = pneg %p41
        %p234 = pneg %p38
        %p235 = scmp.lt.s32.totalorder %s20, 1
        %s236 = scalar_select %p235, %s20, 1
        %s237 = smul.addr %s236, 8
        %s238 = scalar_lea.vmem %s1, %s237
        %p239 = pneg %p67
        %p240 = pneg %p64
        %p241 = scmp.lt.s32.totalorder %s20, 1
        %s242 = scalar_select %p241, %s20, 1
        %s243 = scalar_lea.vmem %s2, %s242
        %p244 = pneg %p93
        %p245 = pneg %p90
        %p246 = pneg %p114
        %p247 = pneg %p111
        %p248 = pneg %p135
        %p249 = pneg %p132
        %p250 = pneg %p161
        %p251 = pneg %p158
        %s252 = sand.u32 %s148, 1
        %s253 = scalar_lea.sflag [#allocation4], %s252
        %s254 = sand.u32 %s148, 1
        %s255 = smul.addr %s254, 8
        %s256 = scalar_lea.vmem [#allocation5], %s255
        %p257 = scmp.lt.s32.totalorder %s20, 1
        %s258 = scalar_select %p257, %s20, 1
        %s259 = smul.addr %s258, 8
        %s260 = smul.addr %s259, 8
        %s261 = scalar_lea.vmem %s0, %s260
        %p262 = scmp.lt.s32.totalorder %s20, 1
        %s263 = scalar_select %p262, %s20, 1
        %s264 = smul.addr %s263, 8
        %s265 = scalar_lea.vmem %s1, %s264
        %p266 = scmp.lt.s32.totalorder %s20, 1
        %s267 = scalar_select %p266, %s20, 1
        %s268 = scalar_lea.vmem %s2, %s267
        %v270 = vld [vmem:[%s3] sm:$0xff]
        %v271 = vld [vmem:[%s3 + $0x8] sm:$0xff]
        %v272 = vld [vmem:[%s265] sm:$0xff]
        %v273 = vld [vmem:[%s261] sm:$0xff]
        %v274 = vld [vmem:[%s261 + $0x8] sm:$0xff]
        %v275 = vld [vmem:[%s261 + $0x10] sm:$0xff]
        %v276 = vld [vmem:[%s261 + $0x18] sm:$0xff]
        %v277 = vld [vmem:[%s261 + $0x20] sm:$0xff]
        %v278 = vld [vmem:[%s261 + $0x28] sm:$0xff]
        %v279 = vld [vmem:[%s261 + $0x30] sm:$0xff]
        %v280 = vld [vmem:[%s261 + $0x38] sm:$0xff]
        %v281 = vld [vmem:[%s268] sm:$0x1]
        %vm282 = vcmask 261120
        %v283 = vsel %vm282, %v273, 0.0
        %284 = vadd.xlane.f32.xlu0 %v283
        %v285 = vpop.xlane.xlu0 %284
        %v286 = vsel %vm282, %v274, 0.0
        %287 = vadd.xlane.f32.xlu0 %v286
        %v288 = vpop.xlane.xlu0 %287
        %v289 = vsel %vm282, %v275, 0.0
        %290 = vadd.xlane.f32.xlu0 %v289
        %v291 = vpop.xlane.xlu0 %290
        %v292 = vsel %vm282, %v276, 0.0
        %293 = vadd.xlane.f32.xlu0 %v292
        %v294 = vpop.xlane.xlu0 %293
        %v295 = vsel %vm282, %v277, 0.0
        %296 = vadd.xlane.f32.xlu0 %v295
        %v297 = vpop.xlane.xlu0 %296
        %v298 = vsel %vm282, %v278, 0.0
        %299 = vadd.xlane.f32.xlu0 %v298
        %v300 = vpop.xlane.xlu0 %299
        %v301 = vsel %vm282, %v279, 0.0
        %302 = vadd.xlane.f32.xlu0 %v301
        %v303 = vpop.xlane.xlu0 %302
        %v304 = vsel %vm282, %v280, 0.0
        %305 = vadd.xlane.f32.xlu0 %v304
        %v306 = vpop.xlane.xlu0 %305
        %v307 = vrcp.pop 32.0
        %v308 = vmul.f32 %v285, %v307
        %v309 = vmul.f32 %v288, %v307
        %v310 = vmul.f32 %v291, %v307
        %v311 = vmul.f32 %v294, %v307
        %v312 = vmul.f32 %v297, %v307
        %v313 = vmul.f32 %v300, %v307
        %v314 = vmul.f32 %v303, %v307
        %v315 = vmul.f32 %v306, %v307
        %v316 = vsub.f32 %v273, %v308
        %v317 = vsub.f32 %v274, %v309
        %v318 = vsub.f32 %v275, %v310
        %v319 = vsub.f32 %v276, %v311
        %v320 = vsub.f32 %v277, %v312
        %v321 = vsub.f32 %v278, %v313
        %v322 = vsub.f32 %v279, %v314
        %v323 = vsub.f32 %v280, %v315
        %v324 = vmul.f32 %v316, %v316
        %v325 = vmul.f32 %v317, %v317
        %v326 = vmul.f32 %v318, %v318
        %v327 = vmul.f32 %v319, %v319
        %v328 = vmul.f32 %v320, %v320
        %v329 = vmul.f32 %v321, %v321
        %v330 = vmul.f32 %v322, %v322
        %v331 = vmul.f32 %v323, %v323
        %v332 = vsel %vm282, %v324, 0.0
        %333 = vadd.xlane.f32.xlu0 %v332
        %v334 = vpop.xlane.xlu0 %333
        %v335 = vsel %vm282, %v325, 0.0
        %336 = vadd.xlane.f32.xlu0 %v335
        %v337 = vpop.xlane.xlu0 %336
        %v338 = vsel %vm282, %v326, 0.0
        %339 = vadd.xlane.f32.xlu0 %v338
        %v340 = vpop.xlane.xlu0 %339
        %v341 = vsel %vm282, %v327, 0.0
        %342 = vadd.xlane.f32.xlu0 %v341
        %v343 = vpop.xlane.xlu0 %342
        %v344 = vsel %vm282, %v328, 0.0
        %345 = vadd.xlane.f32.xlu0 %v344
        %v346 = vpop.xlane.xlu0 %345
        %v347 = vsel %vm282, %v329, 0.0
        %348 = vadd.xlane.f32.xlu0 %v347
        %v349 = vpop.xlane.xlu0 %348
        %v350 = vsel %vm282, %v330, 0.0
        %351 = vadd.xlane.f32.xlu0 %v350
        %v352 = vpop.xlane.xlu0 %351
        %v353 = vsel %vm282, %v331, 0.0
        %354 = vadd.xlane.f32.xlu0 %v353
        %v355 = vpop.xlane.xlu0 %354
        %v356 = vmul.f32 %v334, %v307
        %v357 = vmul.f32 %v337, %v307
        %v358 = vmul.f32 %v340, %v307
        %v359 = vmul.f32 %v343, %v307
        %v360 = vmul.f32 %v346, %v307
        %v361 = vmul.f32 %v349, %v307
        %v362 = vmul.f32 %v352, %v307
        %v363 = vmul.f32 %v355, %v307
        %v364 = vadd.f32 %v356, 1e-06
        %v365 = vadd.f32 %v357, 1e-06
        %v366 = vadd.f32 %v358, 1e-06
        %v367 = vadd.f32 %v359, 1e-06
        %v368 = vadd.f32 %v360, 1e-06
        %v369 = vadd.f32 %v361, 1e-06
        %v370 = vadd.f32 %v362, 1e-06
        %v371 = vadd.f32 %v363, 1e-06
        %v372 = vrsqrt.pop %v364
        %v373 = vrsqrt.pop %v365
        %v374 = vrsqrt.pop %v366
        %v375 = vrsqrt.pop %v367
        %v376 = vrsqrt.pop %v368
        %v377 = vrsqrt.pop %v369
        %v378 = vrsqrt.pop %v370
        %v379 = vrsqrt.pop %v371
        %v380 = vmul.f32 %v316, %v372
        %v381 = vmul.f32 %v317, %v373
        %v382 = vmul.f32 %v318, %v374
        %v383 = vmul.f32 %v319, %v375
        %v384 = vmul.f32 %v320, %v376
        %v385 = vmul.f32 %v321, %v377
        %v386 = vmul.f32 %v322, %v378
        %v387 = vmul.f32 %v323, %v379
        %v388 = vlaneseq
        %v389 = vshrl.u32 %v388, 7
        %v390 = vsub.s32 0, %v389
        %v391 = vrot.slane %v270, %v390
        %v392 = vmul.f32 %v380, %v391
        %v393 = vmul.f32 %v381, %v391
        %v394 = vmul.f32 %v382, %v391
        %v395 = vmul.f32 %v383, %v391
        %v396 = vmul.f32 %v384, %v391
        %v397 = vmul.f32 %v385, %v391
        %v398 = vmul.f32 %v386, %v391
        %v399 = vmul.f32 %v387, %v391
        %v400 = vlaneseq
        %v401 = vshrl.u32 %v400, 7
        %v402 = vsub.s32 1, %v401
        %v403 = vrot.slane %v270, %v402
        %v404 = vadd.f32 %v392, %v403
        %v405 = vadd.f32 %v393, %v403
        %v406 = vadd.f32 %v394, %v403
        %v407 = vadd.f32 %v395, %v403
        %v408 = vadd.f32 %v396, %v403
        %v409 = vadd.f32 %v397, %v403
        %v410 = vadd.f32 %v398, %v403
        %v411 = vadd.f32 %v399, %v403
        %v412 = vpack.c.bf16 %v405, %v404
        %v413 = vpack.c.bf16 %v407, %v406
        %v414 = vpack.c.bf16 %v409, %v408
        %v415 = vpack.c.bf16 %v411, %v410
        %v416 = vsel %vm282, %v272, 0.0
        %417 = vadd.xlane.f32.xlu0 %v416
        %v418 = vpop.xlane.xlu0 %417
        %v419 = vmul.f32 %v418, %v307
        %v420 = vsub.f32 %v272, %v419
        %v421 = vmul.f32 %v420, %v420
        %v422 = vsel %vm282, %v421, 0.0
        %423 = vadd.xlane.f32.xlu0 %v422
        %v424 = vpop.xlane.xlu0 %423
        %v425 = vmul.f32 %v424, %v307
        %v426 = vadd.f32 %v425, 1e-06
        %v427 = vrsqrt.pop %v426
        %v428 = vmul.f32 %v420, %v427
        %v429 = vlaneseq
        %v430 = vshrl.u32 %v429, 7
        %v431 = vsub.s32 2, %v430
        %v432 = vrot.slane %v270, %v431
        %v433 = vmul.f32 %v428, %v432
        %v434 = vlaneseq
        %v435 = vshrl.u32 %v434, 7
        %v436 = vsub.s32 3, %v435
        %v437 = vrot.slane %v270, %v436
        %v438 = vadd.f32 %v433, %v437
        %v439 = vpack.c.bf16 %v438, %v438
        %v440 = vld [vmem:[#allocation2] sm:$0xf]
        %v441 = vld [vmem:[#allocation2 + $0x4] sm:$0xf]
        %v442 = vld [vmem:[#allocation2 + $0x8] sm:$0xf]
        %v443 = vld [vmem:[#allocation2 + $0xc] sm:$0xf]
        %v448 = vunpack.c.l.b16 %v440
        %v449 = vunpack.c.l.b16 %v441
        %v450 = vunpack.c.l.b16 %v442
        %v451 = vunpack.c.l.b16 %v443
        %v452 = vpack.c.b16 %v449, %v448
        %v453 = vpack.c.b16 %v451, %v450
        %v457 = vsel %vm282, %v439, 0
        %459 = vmatprep.subr.bf16.mxu0 0
        %460 = vmatpush1.bf16.msra.mxu0 %v452
        %461 = vmatprep.subr.bf16.mxu0 0
        %462 = vmatpush1.bf16.msra.mxu0 %v453
        %463 = vmatprep.subr.bf16.mxu0 0
        %464 = vmatpush1.bf16.msra.mxu0 0
        %465 = vmatprep.subr.bf16.mxu0 0
        %466 = vmatpush1.bf16.msra.mxu0 0
        %467 = vmatprep.subr.bf16.mxu0 0
        %468 = vmatpush1.bf16.msra.mxu0 0
        %469 = vmatprep.subr.bf16.mxu0 0
        %470 = vmatpush1.bf16.msra.mxu0 0
        %471 = vmatprep.subr.bf16.mxu0 0
        %472 = vmatpush1.bf16.msra.mxu0 0
        %473 = vmatprep.subr.bf16.mxu0 0
        %474 = vmatpush1.bf16.msra.mxu0 0
        %475 = vmatprep.subr.bf16.mxu0 0
        %476 = vmatpush1.bf16.msra.mxu0 0
        %477 = vmatprep.subr.bf16.mxu0 0
        %478 = vmatpush1.bf16.msra.mxu0 0
        %479 = vmatprep.subr.bf16.mxu0 0
        %480 = vmatpush1.bf16.msra.mxu0 0
        %481 = vmatprep.subr.bf16.mxu0 0
        %482 = vmatpush1.bf16.msra.mxu0 0
        %483 = vmatprep.subr.bf16.mxu0 0
        %484 = vmatpush1.bf16.msra.mxu0 0
        %485 = vmatprep.subr.bf16.mxu0 0
        %486 = vmatpush1.bf16.msra.mxu0 0
        %487 = vmatprep.subr.bf16.mxu0 0
        %488 = vmatpush1.bf16.msra.mxu0 0
        %489 = vmatprep.subr.bf16.mxu0 0
        %490 = vmatpush1.bf16.msra.mxu0 0
        %491 = vmatprep.mubr.bf16.mxu0 0
        %492 = vmatmul.mubr.bf16.gmra.mrb[0].mxu0 %v457
        %v493 = vpop.f32.mrb[0].mxu0
        %v494 = vadd.f32 0.0, %v493
        %v495 = vpop.f32.mrb[0].mxu0
        %v496 = vpop.f32.mrb[0].mxu0
        %v497 = vpop.f32.mrb[0].mxu0
        %498 = vdwg.mxu0
        %v499 = vld [vmem:[#allocation2 + $0x10] sm:$0xf]
        %v500 = vld [vmem:[#allocation2 + $0x14] sm:$0xf]
        %v501 = vld [vmem:[#allocation2 + $0x18] sm:$0xf]
        %v502 = vld [vmem:[#allocation2 + $0x1c] sm:$0xf]
        %v507 = vunpack.c.l.b16 %v499
        %v508 = vunpack.c.l.b16 %v500
        %v509 = vunpack.c.l.b16 %v501
        %v510 = vunpack.c.l.b16 %v502
        %v511 = vpack.c.b16 %v508, %v507
        %v512 = vpack.c.b16 %v510, %v509
        %v516 = vsel %vm282, %v412, 0
        %v519 = vsel %vm282, %v413, 0
        %v522 = vsel %vm282, %v414, 0
        %v525 = vsel %vm282, %v415, 0
        %527 = vmatprep.subr.bf16.mxu0 0
        %528 = vmatpush1.bf16.msra.mxu0 %v511
        %529 = vmatprep.subr.bf16.mxu0 0
        %530 = vmatpush1.bf16.msra.mxu0 %v512
        %531 = vmatprep.subr.bf16.mxu0 0
        %532 = vmatpush1.bf16.msra.mxu0 0
        %533 = vmatprep.subr.bf16.mxu0 0
        %534 = vmatpush1.bf16.msra.mxu0 0
        %535 = vmatprep.subr.bf16.mxu0 0
        %536 = vmatpush1.bf16.msra.mxu0 0
        %537 = vmatprep.subr.bf16.mxu0 0
        %538 = vmatpush1.bf16.msra.mxu0 0
        %539 = vmatprep.subr.bf16.mxu0 0
        %540 = vmatpush1.bf16.msra.mxu0 0
        %541 = vmatprep.subr.bf16.mxu0 0
        %542 = vmatpush1.bf16.msra.mxu0 0
        %543 = vmatprep.subr.bf16.mxu0 0
        %544 = vmatpush1.bf16.msra.mxu0 0
        %545 = vmatprep.subr.bf16.mxu0 0
        %546 = vmatpush1.bf16.msra.mxu0 0
        %547 = vmatprep.subr.bf16.mxu0 0
        %548 = vmatpush1.bf16.msra.mxu0 0
        %549 = vmatprep.subr.bf16.mxu0 0
        %550 = vmatpush1.bf16.msra.mxu0 0
        %551 = vmatprep.subr.bf16.mxu0 0
        %552 = vmatpush1.bf16.msra.mxu0 0
        %553 = vmatprep.subr.bf16.mxu0 0
        %554 = vmatpush1.bf16.msra.mxu0 0
        %555 = vmatprep.subr.bf16.mxu0 0
        %556 = vmatpush1.bf16.msra.mxu0 0
        %557 = vmatprep.subr.bf16.mxu0 0
        %558 = vmatpush1.bf16.msra.mxu0 0
        %559 = vmatprep.mubr.bf16.mxu0 0
        %560 = vmatmul.mubr.bf16.gmra.mrb[0].mxu0 %v516
        %v561 = vpop.f32.mrb[0].mxu0
        %v562 = vadd.f32 0.0, %v561
        %v563 = vpop.f32.mrb[0].mxu0
        %v564 = vpop.f32.mrb[0].mxu0
        %v565 = vadd.f32 0.0, %v564
        %v566 = vpop.f32.mrb[0].mxu0
        %567 = vmatprep.mubr.bf16.mxu0 0
        %568 = vmatmul.mubr.bf16.gmra.mrb[0].mxu0 %v519
        %v569 = vpop.f32.mrb[0].mxu0
        %v570 = vadd.f32 0.0, %v569
        %v571 = vpop.f32.mrb[0].mxu0
        %v572 = vpop.f32.mrb[0].mxu0
        %v573 = vadd.f32 0.0, %v572
        %v574 = vpop.f32.mrb[0].mxu0
        %575 = vmatprep.mubr.bf16.mxu0 0
        %576 = vmatmul.mubr.bf16.gmra.mrb[0].mxu0 %v522
        %v577 = vpop.f32.mrb[0].mxu0
        %v578 = vadd.f32 0.0, %v577
        %v579 = vpop.f32.mrb[0].mxu0
        %v580 = vpop.f32.mrb[0].mxu0
        %v581 = vadd.f32 0.0, %v580
        %v582 = vpop.f32.mrb[0].mxu0
        %583 = vmatprep.mubr.bf16.mxu0 0
        %584 = vmatmul.mubr.bf16.gmra.mrb[0].mxu0 %v525
        %v585 = vpop.f32.mrb[0].mxu0
        %v586 = vadd.f32 0.0, %v585
        %v587 = vpop.f32.mrb[0].mxu0
        %v588 = vpop.f32.mrb[0].mxu0
        %v589 = vadd.f32 0.0, %v588
        %v590 = vpop.f32.mrb[0].mxu0
        %591 = vdwg.mxu0
        %v592 = vld [vmem:[#allocation2 + $0x20] sm:$0xf]
        %v593 = vld [vmem:[#allocation2 + $0x24] sm:$0xf]
        %v594 = vld [vmem:[#allocation2 + $0x28] sm:$0xf]
        %v595 = vld [vmem:[#allocation2 + $0x2c] sm:$0xf]
        %v600 = vunpack.c.l.b16 %v592
        %v601 = vunpack.c.l.b16 %v593
        %v602 = vunpack.c.l.b16 %v594
        %v603 = vunpack.c.l.b16 %v595
        %v604 = vpack.c.b16 %v601, %v600
        %v605 = vpack.c.b16 %v603, %v602
        %608 = vmatprep.subr.bf16.mxu0 0
        %609 = vmatpush1.bf16.msra.mxu0 %v604
        %610 = vmatprep.subr.bf16.mxu0 0
        %611 = vmatpush1.bf16.msra.mxu0 %v605
        %612 = vmatprep.subr.bf16.mxu0 0
        %613 = vmatpush1.bf16.msra.mxu0 0
        %614 = vmatprep.subr.bf16.mxu0 0
        %615 = vmatpush1.bf16.msra.mxu0 0
        %616 = vmatprep.subr.bf16.mxu0 0
        %617 = vmatpush1.bf16.msra.mxu0 0
        %618 = vmatprep.subr.bf16.mxu0 0
        %619 = vmatpush1.bf16.msra.mxu0 0
        %620 = vmatprep.subr.bf16.mxu0 0
        %621 = vmatpush1.bf16.msra.mxu0 0
        %622 = vmatprep.subr.bf16.mxu0 0
        %623 = vmatpush1.bf16.msra.mxu0 0
        %624 = vmatprep.subr.bf16.mxu0 0
        %625 = vmatpush1.bf16.msra.mxu0 0
        %626 = vmatprep.subr.bf16.mxu0 0
        %627 = vmatpush1.bf16.msra.mxu0 0
        %628 = vmatprep.subr.bf16.mxu0 0
        %629 = vmatpush1.bf16.msra.mxu0 0
        %630 = vmatprep.subr.bf16.mxu0 0
        %631 = vmatpush1.bf16.msra.mxu0 0
        %632 = vmatprep.subr.bf16.mxu0 0
        %633 = vmatpush1.bf16.msra.mxu0 0
        %634 = vmatprep.subr.bf16.mxu0 0
        %635 = vmatpush1.bf16.msra.mxu0 0
        %636 = vmatprep.subr.bf16.mxu0 0
        %637 = vmatpush1.bf16.msra.mxu0 0
        %638 = vmatprep.subr.bf16.mxu0 0
        %639 = vmatpush1.bf16.msra.mxu0 0
        %640 = vmatprep.mubr.bf16.mxu0 0
        %641 = vmatmul.mubr.bf16.gmra.mrb[0].mxu0 %v516
        %v642 = vpop.f32.mrb[0].mxu0
        %v643 = vadd.f32 0.0, %v642
        %v644 = vpop.f32.mrb[0].mxu0
        %v645 = vpop.f32.mrb[0].mxu0
        %v646 = vadd.f32 0.0, %v645
        %v647 = vpop.f32.mrb[0].mxu0
        %648 = vmatprep.mubr.bf16.mxu0 0
        %649 = vmatmul.mubr.bf16.gmra.mrb[0].mxu0 %v519
        %v650 = vpop.f32.mrb[0].mxu0
        %v651 = vadd.f32 0.0, %v650
        %v652 = vpop.f32.mrb[0].mxu0
        %v653 = vpop.f32.mrb[0].mxu0
        %v654 = vadd.f32 0.0, %v653
        %v655 = vpop.f32.mrb[0].mxu0
        %656 = vmatprep.mubr.bf16.mxu0 0
        %657 = vmatmul.mubr.bf16.gmra.mrb[0].mxu0 %v522
        %v658 = vpop.f32.mrb[0].mxu0
        %v659 = vadd.f32 0.0, %v658
        %v660 = vpop.f32.mrb[0].mxu0
        %v661 = vpop.f32.mrb[0].mxu0
        %v662 = vadd.f32 0.0, %v661
        %v663 = vpop.f32.mrb[0].mxu0
        %664 = vmatprep.mubr.bf16.mxu0 0
        %665 = vmatmul.mubr.bf16.gmra.mrb[0].mxu0 %v525
        %v666 = vpop.f32.mrb[0].mxu0
        %v667 = vadd.f32 0.0, %v666
        %v668 = vpop.f32.mrb[0].mxu0
        %v669 = vpop.f32.mrb[0].mxu0
        %v670 = vadd.f32 0.0, %v669
        %v671 = vpop.f32.mrb[0].mxu0
        %672 = vdwg.mxu0
        %v673 = vpack.c.bf16 %v494, %v494
        %v674 = vpack.c.bf16 %v565, %v562
        %v675 = vpack.c.bf16 %v573, %v570
        %v676 = vpack.c.bf16 %v581, %v578
        %v677 = vpack.c.bf16 %v589, %v586
        %v678 = vpack.c.bf16 %v646, %v643
        %v679 = vpack.c.bf16 %v654, %v651
        %v680 = vpack.c.bf16 %v662, %v659
        %v681 = vpack.c.bf16 %v670, %v667
        %682 = vmatprep.subr.bf16.mxu0 0
        %683 = vmatpush1.bf16.xpose.msra.mxu0 %v674
        %684 = vmatprep.subr.bf16.mxu0 0
        %685 = vmatpush1.bf16.xpose.msra.mxu0 %v675
        %686 = vmatprep.subr.bf16.mxu0 0
        %687 = vmatpush1.bf16.xpose.msra.mxu0 %v676
        %688 = vmatprep.subr.bf16.mxu0 0
        %689 = vmatpush1.bf16.xpose.msra.mxu0 %v677
        %690 = vmatprep.subr.bf16.mxu0 0
        %691 = vmatpush1.bf16.xpose.msra.mxu0 0
        %692 = vmatprep.subr.bf16.mxu0 0
        %693 = vmatpush1.bf16.xpose.msra.mxu0 0
        %694 = vmatprep.subr.bf16.mxu0 0
        %695 = vmatpush1.bf16.xpose.msra.mxu0 0
        %696 = vmatprep.subr.bf16.mxu0 0
        %697 = vmatpush1.bf16.xpose.msra.mxu0 0
        %698 = vmatprep.subr.bf16.mxu0 0
        %699 = vmatpush1.bf16.xpose.msra.mxu0 0
        %700 = vmatprep.subr.bf16.mxu0 0
        %701 = vmatpush1.bf16.xpose.msra.mxu0 0
        %702 = vmatprep.subr.bf16.mxu0 0
        %703 = vmatpush1.bf16.xpose.msra.mxu0 0
        %704 = vmatprep.subr.bf16.mxu0 0
        %705 = vmatpush1.bf16.xpose.msra.mxu0 0
        %706 = vmatprep.subr.bf16.mxu0 0
        %707 = vmatpush1.bf16.xpose.msra.mxu0 0
        %708 = vmatprep.subr.bf16.mxu0 0
        %709 = vmatpush1.bf16.xpose.msra.mxu0 0
        %710 = vmatprep.subr.bf16.mxu0 0
        %711 = vmatpush1.bf16.xpose.msra.mxu0 0
        %712 = vmatprep.subr.bf16.mxu0 0
        %713 = vmatpush1.bf16.xpose.msra.mxu0 0
        %714 = vmatprep.mubr.bf16.mxu0 0
        %715 = vmatmul.mubr.bf16.gmra.mrb[0].mxu0 %v673
        %v716 = vpop.f32.mrb[0].mxu0
        %v717 = vadd.f32 0.0, %v716
        %v718 = vpop.f32.mrb[0].mxu0
        %v719 = vpop.f32.mrb[0].mxu0
        %v720 = vpop.f32.mrb[0].mxu0
        %721 = vdwg.mxu0
        %vm722 = vcmask 523264
        %v723 = vsel %vm722, %v717, -inf
        %v724 = vrot.slane %v723, 4
        %v725 = vmax.f32 %v723, %v724
        %v726 = vrot.slane %v725, 2
        %v727 = vmax.f32 %v725, %v726
        %v728 = vrot.slane %v727, 1
        %v729 = vmax.f32 %v727, %v728
        %v730 = vsub.f32 %v717, %v729
        %v731 = vmul.f32 %v730, 1.442695
        %v732 = vpow.pop %v731
        %v733 = vsel %vm722, %v732, 0.0
        %v734 = vrot.slane %v733, 4
        %v735 = vadd.f32 %v733, %v734
        %v736 = vrot.slane %v735, 2
        %v737 = vadd.f32 %v735, %v736
        %v738 = vrot.slane %v737, 1
        %v739 = vadd.f32 %v737, %v738
        %v740 = vrcp.pop %v739
        %v741 = vmul.f32 %v732, %v740
        %v743 = vlaneseq
        %v744 = vshrl.u32 %v743, 7
        %v745 = vsub.s32 0, %v744
        %v746 = vrot.slane %v281, %v745
        %v748 = vmul.f32 %v741, %v746
        %v749 = vsel %vm722, %v748, 0.0
        %750 = vadd.xlane.f32.xlu0 %v749
        %v751 = vpop.xlane.xlu0 %750
        %v752 = vadd.f32 %v751, 1e-08
        %v753 = vrcp.pop %v752
        %v754 = vmul.f32 %v748, %v753
        %v755 = vpack.c.bf16 %v754, %v754
        %v757 = vsel %vm722, %v755, 0
        %759 = vmatprep.subr.bf16.mxu0 0
        %760 = vmatpush1.bf16.msra.mxu0 %v678
        %761 = vmatprep.subr.bf16.mxu0 0
        %762 = vmatpush1.bf16.msra.mxu0 %v679
        %763 = vmatprep.subr.bf16.mxu0 0
        %764 = vmatpush1.bf16.msra.mxu0 %v680
        %765 = vmatprep.subr.bf16.mxu0 0
        %766 = vmatpush1.bf16.msra.mxu0 %v681
        %767 = vmatprep.subr.bf16.mxu0 0
        %768 = vmatpush1.bf16.msra.mxu0 0
        %769 = vmatprep.subr.bf16.mxu0 0
        %770 = vmatpush1.bf16.msra.mxu0 0
        %771 = vmatprep.subr.bf16.mxu0 0
        %772 = vmatpush1.bf16.msra.mxu0 0
        %773 = vmatprep.subr.bf16.mxu0 0
        %774 = vmatpush1.bf16.msra.mxu0 0
        %775 = vmatprep.subr.bf16.mxu0 0
        %776 = vmatpush1.bf16.msra.mxu0 0
        %777 = vmatprep.subr.bf16.mxu0 0
        %778 = vmatpush1.bf16.msra.mxu0 0
        %779 = vmatprep.subr.bf16.mxu0 0
        %780 = vmatpush1.bf16.msra.mxu0 0
        %781 = vmatprep.subr.bf16.mxu0 0
        %782 = vmatpush1.bf16.msra.mxu0 0
        %783 = vmatprep.subr.bf16.mxu0 0
        %784 = vmatpush1.bf16.msra.mxu0 0
        %785 = vmatprep.subr.bf16.mxu0 0
        %786 = vmatpush1.bf16.msra.mxu0 0
        %787 = vmatprep.subr.bf16.mxu0 0
        %788 = vmatpush1.bf16.msra.mxu0 0
        %789 = vmatprep.subr.bf16.mxu0 0
        %790 = vmatpush1.bf16.msra.mxu0 0
        %791 = vmatprep.mubr.bf16.mxu0 0
        %792 = vmatmul.mubr.bf16.gmra.mrb[0].mxu0 %v757
        %v793 = vpop.f32.mrb[0].mxu0
        %v794 = vadd.f32 0.0, %v793
        %v795 = vpop.f32.mrb[0].mxu0
        %v796 = vpop.f32.mrb[0].mxu0
        %v797 = vpop.f32.mrb[0].mxu0
        %798 = vdwg.mxu0
        %v799 = vadd.f32 %v272, %v794
        %v800 = vsel %vm282, %v799, 0.0
        %801 = vadd.xlane.f32.xlu0 %v800
        %v802 = vpop.xlane.xlu0 %801
        %v803 = vmul.f32 %v802, %v307
        %v804 = vsub.f32 %v799, %v803
        %v805 = vmul.f32 %v804, %v804
        %v806 = vsel %vm282, %v805, 0.0
        %807 = vadd.xlane.f32.xlu0 %v806
        %v808 = vpop.xlane.xlu0 %807
        %v809 = vmul.f32 %v808, %v307
        %v810 = vadd.f32 %v809, 1e-06
        %v811 = vrsqrt.pop %v810
        %v812 = vmul.f32 %v804, %v811
        %v813 = vlaneseq
        %v814 = vshrl.u32 %v813, 7
        %v815 = vsub.s32 4, %v814
        %v816 = vrot.slane %v270, %v815
        %v817 = vmul.f32 %v812, %v816
        %v818 = vlaneseq
        %v819 = vshrl.u32 %v818, 7
        %v820 = vsub.s32 5, %v819
        %v821 = vrot.slane %v270, %v820
        %v822 = vadd.f32 %v817, %v821
        %v823 = vpack.c.bf16 %v822, %v822
        %v824 = vld [vmem:[#allocation2 + $0x30] sm:$0xf]
        %v825 = vld [vmem:[#allocation2 + $0x34] sm:$0xf]
        %v826 = vld [vmem:[#allocation2 + $0x38] sm:$0xf]
        %v827 = vld [vmem:[#allocation2 + $0x3c] sm:$0xf]
        %v828 = vlaneseq
        %v829 = vshrl.u32 %v828, 7
        %v830 = vsub.s32 6, %v829
        %v831 = vrot.slane %v270, %v830
        %v836 = vunpack.c.l.b16 %v824
        %v837 = vunpack.c.l.b16 %v825
        %v838 = vunpack.c.l.b16 %v826
        %v839 = vunpack.c.l.b16 %v827
        %v840 = vpack.c.b16 %v837, %v836
        %v841 = vpack.c.b16 %v839, %v838
        %v845 = vsel %vm282, %v823, 0
        %847 = vmatprep.subr.bf16.mxu0 0
        %848 = vmatpush1.bf16.msra.mxu0 %v840
        %849 = vmatprep.subr.bf16.mxu0 0
        %850 = vmatpush1.bf16.msra.mxu0 %v841
        %851 = vmatprep.subr.bf16.mxu0 0
        %852 = vmatpush1.bf16.msra.mxu0 0
        %853 = vmatprep.subr.bf16.mxu0 0
        %854 = vmatpush1.bf16.msra.mxu0 0
        %855 = vmatprep.subr.bf16.mxu0 0
        %856 = vmatpush1.bf16.msra.mxu0 0
        %857 = vmatprep.subr.bf16.mxu0 0
        %858 = vmatpush1.bf16.msra.mxu0 0
        %859 = vmatprep.subr.bf16.mxu0 0
        %860 = vmatpush1.bf16.msra.mxu0 0
        %861 = vmatprep.subr.bf16.mxu0 0
        %862 = vmatpush1.bf16.msra.mxu0 0
        %863 = vmatprep.subr.bf16.mxu0 0
        %864 = vmatpush1.bf16.msra.mxu0 0
        %865 = vmatprep.subr.bf16.mxu0 0
        %866 = vmatpush1.bf16.msra.mxu0 0
        %867 = vmatprep.subr.bf16.mxu0 0
        %868 = vmatpush1.bf16.msra.mxu0 0
        %869 = vmatprep.subr.bf16.mxu0 0
        %870 = vmatpush1.bf16.msra.mxu0 0
        %871 = vmatprep.subr.bf16.mxu0 0
        %872 = vmatpush1.bf16.msra.mxu0 0
        %873 = vmatprep.subr.bf16.mxu0 0
        %874 = vmatpush1.bf16.msra.mxu0 0
        %875 = vmatprep.subr.bf16.mxu0 0
        %876 = vmatpush1.bf16.msra.mxu0 0
        %877 = vmatprep.subr.bf16.mxu0 0
        %878 = vmatpush1.bf16.msra.mxu0 0
        %879 = vmatprep.mubr.bf16.mxu0 0
        %880 = vmatmul.mubr.bf16.gmra.mrb[0].mxu0 %v845
        %v881 = vpop.f32.mrb[0].mxu0
        %v882 = vadd.f32 %v831, %v881
        %v883 = vpop.f32.mrb[0].mxu0
        %v884 = vpop.f32.mrb[0].mxu0
        %v885 = vpop.f32.mrb[0].mxu0
        %886 = vdwg.mxu0
        %v887 = vmax.f32 %v882, 0.0
        %v888 = vpack.c.bf16 %v887, %v887
        %v889 = vld [vmem:[#allocation2 + $0x40] sm:$0xf]
        %v890 = vld [vmem:[#allocation2 + $0x44] sm:$0xf]
        %v891 = vld [vmem:[#allocation2 + $0x48] sm:$0xf]
        %v892 = vld [vmem:[#allocation2 + $0x4c] sm:$0xf]
        %v893 = vld [vmem:[#allocation2 + $0x50] sm:$0xf]
        %v894 = vld [vmem:[#allocation2 + $0x54] sm:$0xf]
        %v895 = vld [vmem:[#allocation2 + $0x58] sm:$0xf]
        %v896 = vld [vmem:[#allocation2 + $0x5c] sm:$0xf]
        %v897 = vld [vmem:[#allocation2 + $0x60] sm:$0xf]
        %v898 = vld [vmem:[#allocation2 + $0x64] sm:$0xf]
        %v899 = vld [vmem:[#allocation2 + $0x68] sm:$0xf]
        %v900 = vld [vmem:[#allocation2 + $0x6c] sm:$0xf]
        %v901 = vld [vmem:[#allocation2 + $0x70] sm:$0xf]
        %v902 = vld [vmem:[#allocation2 + $0x74] sm:$0xf]
        %v903 = vld [vmem:[#allocation2 + $0x78] sm:$0xf]
        %v904 = vld [vmem:[#allocation2 + $0x7c] sm:$0xf]
        %v921 = vunpack.c.l.b16 %v889
        %v922 = vunpack.c.l.b16 %v890
        %v923 = vunpack.c.l.b16 %v891
        %v924 = vunpack.c.l.b16 %v892
        %v925 = vunpack.c.l.b16 %v893
        %v926 = vunpack.c.l.b16 %v894
        %v927 = vunpack.c.l.b16 %v895
        %v928 = vunpack.c.l.b16 %v896
        %v929 = vunpack.c.l.b16 %v897
        %v930 = vunpack.c.l.b16 %v898
        %v931 = vunpack.c.l.b16 %v899
        %v932 = vunpack.c.l.b16 %v900
        %v933 = vunpack.c.l.b16 %v901
        %v934 = vunpack.c.l.b16 %v902
        %v935 = vunpack.c.l.b16 %v903
        %v936 = vunpack.c.l.b16 %v904
        %v937 = vpack.c.b16 %v922, %v921
        %v938 = vpack.c.b16 %v924, %v923
        %v939 = vpack.c.b16 %v926, %v925
        %v940 = vpack.c.b16 %v928, %v927
        %v941 = vpack.c.b16 %v930, %v929
        %v942 = vpack.c.b16 %v932, %v931
        %v943 = vpack.c.b16 %v934, %v933
        %v944 = vpack.c.b16 %v936, %v935
        %953 = vmatprep.subr.bf16.mxu0 0
        %954 = vmatpush1.bf16.msra.mxu0 %v937
        %955 = vmatprep.subr.bf16.mxu0 0
        %956 = vmatpush1.bf16.msra.mxu0 %v938
        %957 = vmatprep.subr.bf16.mxu0 0
        %958 = vmatpush1.bf16.msra.mxu0 %v939
        %959 = vmatprep.subr.bf16.mxu0 0
        %960 = vmatpush1.bf16.msra.mxu0 %v940
        %961 = vmatprep.subr.bf16.mxu0 0
        %962 = vmatpush1.bf16.msra.mxu0 %v941
        %963 = vmatprep.subr.bf16.mxu0 0
        %964 = vmatpush1.bf16.msra.mxu0 %v942
        %965 = vmatprep.subr.bf16.mxu0 0
        %966 = vmatpush1.bf16.msra.mxu0 %v943
        %967 = vmatprep.subr.bf16.mxu0 0
        %968 = vmatpush1.bf16.msra.mxu0 %v944
        %969 = vmatprep.subr.bf16.mxu0 0
        %970 = vmatpush1.bf16.msra.mxu0 0
        %971 = vmatprep.subr.bf16.mxu0 0
        %972 = vmatpush1.bf16.msra.mxu0 0
        %973 = vmatprep.subr.bf16.mxu0 0
        %974 = vmatpush1.bf16.msra.mxu0 0
        %975 = vmatprep.subr.bf16.mxu0 0
        %976 = vmatpush1.bf16.msra.mxu0 0
        %977 = vmatprep.subr.bf16.mxu0 0
        %978 = vmatpush1.bf16.msra.mxu0 0
        %979 = vmatprep.subr.bf16.mxu0 0
        %980 = vmatpush1.bf16.msra.mxu0 0
        %981 = vmatprep.subr.bf16.mxu0 0
        %982 = vmatpush1.bf16.msra.mxu0 0
        %983 = vmatprep.subr.bf16.mxu0 0
        %984 = vmatpush1.bf16.msra.mxu0 0
        %985 = vmatprep.mubr.bf16.mxu0 0
        %986 = vmatmul.mubr.bf16.gmra.mrb[0].mxu0 %v888
        %v987 = vpop.f32.mrb[0].mxu0
        %v988 = vadd.f32 0.0, %v987
        %v989 = vpop.f32.mrb[0].mxu0
        %v990 = vpop.f32.mrb[0].mxu0
        %v991 = vpop.f32.mrb[0].mxu0
        %992 = vdwg.mxu0
        %v993 = vadd.f32 %v799, %v988
        %v994 = vlaneseq
        %v995 = vshrl.u32 %v994, 7
        %v996 = vsub.s32 7, %v995
        %v997 = vrot.slane %v270, %v996
        %v998 = vadd.f32 %v993, %v997
        %v999 = vsel %vm282, %v998, 0.0
        %1000 = vadd.xlane.f32.xlu0 %v999
        %v1001 = vpop.xlane.xlu0 %1000
        %v1002 = vmul.f32 %v1001, %v307
        %v1003 = vsub.f32 %v998, %v1002
        %v1004 = vmul.f32 %v1003, %v1003
        %v1005 = vsel %vm282, %v1004, 0.0
        %1006 = vadd.xlane.f32.xlu0 %v1005
        %v1007 = vpop.xlane.xlu0 %1006
        %v1008 = vmul.f32 %v1007, %v307
        %v1009 = vadd.f32 %v1008, 1e-06
        %v1010 = vrsqrt.pop %v1009
        %v1011 = vmul.f32 %v1003, %v1010
        %v1012 = vlaneseq
        %v1013 = vshrl.u32 %v1012, 7
        %v1014 = vsub.s32 0, %v1013
        %v1015 = vrot.slane %v271, %v1014
        %v1016 = vmul.f32 %v1011, %v1015
        %v1017 = vlaneseq
        %v1018 = vshrl.u32 %v1017, 7
        %v1019 = vsub.s32 1, %v1018
        %v1020 = vrot.slane %v271, %v1019
        %v1021 = vadd.f32 %v1016, %v1020
        %v1022 = vpack.c.bf16 %v1021, %v1021
        %v1023 = vld [vmem:[#allocation2 + $0x80] sm:$0xf]
        %v1024 = vld [vmem:[#allocation2 + $0x84] sm:$0xf]
        %v1025 = vld [vmem:[#allocation2 + $0x88] sm:$0xf]
        %v1026 = vld [vmem:[#allocation2 + $0x8c] sm:$0xf]
        %v1031 = vunpack.c.l.b16 %v1023
        %v1032 = vunpack.c.l.b16 %v1024
        %v1033 = vunpack.c.l.b16 %v1025
        %v1034 = vunpack.c.l.b16 %v1026
        %v1035 = vpack.c.b16 %v1032, %v1031
        %v1036 = vpack.c.b16 %v1034, %v1033
        %v1040 = vsel %vm282, %v1022, 0
        %1042 = vmatprep.subr.bf16.mxu0 0
        %1043 = vmatpush1.bf16.msra.mxu0 %v1035
        %1044 = vmatprep.subr.bf16.mxu0 0
        %1045 = vmatpush1.bf16.msra.mxu0 %v1036
        %1046 = vmatprep.subr.bf16.mxu0 0
        %1047 = vmatpush1.bf16.msra.mxu0 0
        %1048 = vmatprep.subr.bf16.mxu0 0
        %1049 = vmatpush1.bf16.msra.mxu0 0
        %1050 = vmatprep.subr.bf16.mxu0 0
        %1051 = vmatpush1.bf16.msra.mxu0 0
        %1052 = vmatprep.subr.bf16.mxu0 0
        %1053 = vmatpush1.bf16.msra.mxu0 0
        %1054 = vmatprep.subr.bf16.mxu0 0
        %1055 = vmatpush1.bf16.msra.mxu0 0
        %1056 = vmatprep.subr.bf16.mxu0 0
        %1057 = vmatpush1.bf16.msra.mxu0 0
        %1058 = vmatprep.subr.bf16.mxu0 0
        %1059 = vmatpush1.bf16.msra.mxu0 0
        %1060 = vmatprep.subr.bf16.mxu0 0
        %1061 = vmatpush1.bf16.msra.mxu0 0
        %1062 = vmatprep.subr.bf16.mxu0 0
        %1063 = vmatpush1.bf16.msra.mxu0 0
        %1064 = vmatprep.subr.bf16.mxu0 0
        %1065 = vmatpush1.bf16.msra.mxu0 0
        %1066 = vmatprep.subr.bf16.mxu0 0
        %1067 = vmatpush1.bf16.msra.mxu0 0
        %1068 = vmatprep.subr.bf16.mxu0 0
        %1069 = vmatpush1.bf16.msra.mxu0 0
        %1070 = vmatprep.subr.bf16.mxu0 0
        %1071 = vmatpush1.bf16.msra.mxu0 0
        %1072 = vmatprep.subr.bf16.mxu0 0
        %1073 = vmatpush1.bf16.msra.mxu0 0
        %1074 = vmatprep.mubr.bf16.mxu0 0
        %1075 = vmatmul.mubr.bf16.gmra.mrb[0].mxu0 %v1040
        %v1076 = vpop.f32.mrb[0].mxu0
        %v1077 = vadd.f32 0.0, %v1076
        %v1078 = vpop.f32.mrb[0].mxu0
        %v1079 = vpop.f32.mrb[0].mxu0
        %v1080 = vpop.f32.mrb[0].mxu0
        %1081 = vdwg.mxu0
        %v1082 = vld [vmem:[#allocation2 + $0x90] sm:$0xf]
        %v1083 = vld [vmem:[#allocation2 + $0x94] sm:$0xf]
        %v1084 = vld [vmem:[#allocation2 + $0x98] sm:$0xf]
        %v1085 = vld [vmem:[#allocation2 + $0x9c] sm:$0xf]
        %v1090 = vunpack.c.l.b16 %v1082
        %v1091 = vunpack.c.l.b16 %v1083
        %v1092 = vunpack.c.l.b16 %v1084
        %v1093 = vunpack.c.l.b16 %v1085
        %v1094 = vpack.c.b16 %v1091, %v1090
        %v1095 = vpack.c.b16 %v1093, %v1092
        %1098 = vmatprep.subr.bf16.mxu0 0
        %1099 = vmatpush1.bf16.msra.mxu0 %v1094
        %1100 = vmatprep.subr.bf16.mxu0 0
        %1101 = vmatpush1.bf16.msra.mxu0 %v1095
        %1102 = vmatprep.subr.bf16.mxu0 0
        %1103 = vmatpush1.bf16.msra.mxu0 0
        %1104 = vmatprep.subr.bf16.mxu0 0
        %1105 = vmatpush1.bf16.msra.mxu0 0
        %1106 = vmatprep.subr.bf16.mxu0 0
        %1107 = vmatpush1.bf16.msra.mxu0 0
        %1108 = vmatprep.subr.bf16.mxu0 0
        %1109 = vmatpush1.bf16.msra.mxu0 0
        %1110 = vmatprep.subr.bf16.mxu0 0
        %1111 = vmatpush1.bf16.msra.mxu0 0
        %1112 = vmatprep.subr.bf16.mxu0 0
        %1113 = vmatpush1.bf16.msra.mxu0 0
        %1114 = vmatprep.subr.bf16.mxu0 0
        %1115 = vmatpush1.bf16.msra.mxu0 0
        %1116 = vmatprep.subr.bf16.mxu0 0
        %1117 = vmatpush1.bf16.msra.mxu0 0
        %1118 = vmatprep.subr.bf16.mxu0 0
        %1119 = vmatpush1.bf16.msra.mxu0 0
        %1120 = vmatprep.subr.bf16.mxu0 0
        %1121 = vmatpush1.bf16.msra.mxu0 0
        %1122 = vmatprep.subr.bf16.mxu0 0
        %1123 = vmatpush1.bf16.msra.mxu0 0
        %1124 = vmatprep.subr.bf16.mxu0 0
        %1125 = vmatpush1.bf16.msra.mxu0 0
        %1126 = vmatprep.subr.bf16.mxu0 0
        %1127 = vmatpush1.bf16.msra.mxu0 0
        %1128 = vmatprep.subr.bf16.mxu0 0
        %1129 = vmatpush1.bf16.msra.mxu0 0
        %1130 = vmatprep.mubr.bf16.mxu0 0
        %1131 = vmatmul.mubr.bf16.gmra.mrb[0].mxu0 %v1040
        %v1132 = vpop.f32.mrb[0].mxu0
        %v1133 = vadd.f32 0.0, %v1132
        %v1134 = vpop.f32.mrb[0].mxu0
        %v1135 = vpop.f32.mrb[0].mxu0
        %v1136 = vpop.f32.mrb[0].mxu0
        %1137 = vdwg.mxu0
        %v1138 = vld [vmem:[#allocation2 + $0xa0] sm:$0xf]
        %v1139 = vld [vmem:[#allocation2 + $0xa4] sm:$0xf]
        %v1140 = vld [vmem:[#allocation2 + $0xa8] sm:$0xf]
        %v1141 = vld [vmem:[#allocation2 + $0xac] sm:$0xf]
        %v1146 = vunpack.c.l.b16 %v1138
        %v1147 = vunpack.c.l.b16 %v1139
        %v1148 = vunpack.c.l.b16 %v1140
        %v1149 = vunpack.c.l.b16 %v1141
        %v1150 = vpack.c.b16 %v1147, %v1146
        %v1151 = vpack.c.b16 %v1149, %v1148
        %1154 = vmatprep.subr.bf16.mxu0 0
        %1155 = vmatpush1.bf16.msra.mxu0 %v1150
        %1156 = vmatprep.subr.bf16.mxu0 0
        %1157 = vmatpush1.bf16.msra.mxu0 %v1151
        %1158 = vmatprep.subr.bf16.mxu0 0
        %1159 = vmatpush1.bf16.msra.mxu0 0
        %1160 = vmatprep.subr.bf16.mxu0 0
        %1161 = vmatpush1.bf16.msra.mxu0 0
        %1162 = vmatprep.subr.bf16.mxu0 0
        %1163 = vmatpush1.bf16.msra.mxu0 0
        %1164 = vmatprep.subr.bf16.mxu0 0
        %1165 = vmatpush1.bf16.msra.mxu0 0
        %1166 = vmatprep.subr.bf16.mxu0 0
        %1167 = vmatpush1.bf16.msra.mxu0 0
        %1168 = vmatprep.subr.bf16.mxu0 0
        %1169 = vmatpush1.bf16.msra.mxu0 0
        %1170 = vmatprep.subr.bf16.mxu0 0
        %1171 = vmatpush1.bf16.msra.mxu0 0
        %1172 = vmatprep.subr.bf16.mxu0 0
        %1173 = vmatpush1.bf16.msra.mxu0 0
        %1174 = vmatprep.subr.bf16.mxu0 0
        %1175 = vmatpush1.bf16.msra.mxu0 0
        %1176 = vmatprep.subr.bf16.mxu0 0
        %1177 = vmatpush1.bf16.msra.mxu0 0
        %1178 = vmatprep.subr.bf16.mxu0 0
        %1179 = vmatpush1.bf16.msra.mxu0 0
        %1180 = vmatprep.subr.bf16.mxu0 0
        %1181 = vmatpush1.bf16.msra.mxu0 0
        %1182 = vmatprep.subr.bf16.mxu0 0
        %1183 = vmatpush1.bf16.msra.mxu0 0
        %1184 = vmatprep.subr.bf16.mxu0 0
        %1185 = vmatpush1.bf16.msra.mxu0 0
        %1186 = vmatprep.mubr.bf16.mxu0 0
        %1187 = vmatmul.mubr.bf16.gmra.mrb[0].mxu0 %v1040
        %v1188 = vpop.f32.mrb[0].mxu0
        %v1189 = vadd.f32 0.0, %v1188
        %v1190 = vpop.f32.mrb[0].mxu0
        %v1191 = vpop.f32.mrb[0].mxu0
        %v1192 = vpop.f32.mrb[0].mxu0
        %1193 = vdwg.mxu0
        %v1194 = vpack.c.bf16 %v1077, %v1077
        %v1195 = vpack.c.bf16 %v1133, %v1133
        %v1196 = vpack.c.bf16 %v1189, %v1189
        %1197 = vmatprep.subr.bf16.mxu0 0
        %1198 = vmatpush1.bf16.xpose.msra.mxu0 %v1195
        %1199 = vmatprep.subr.bf16.mxu0 0
        %1200 = vmatpush1.bf16.xpose.msra.mxu0 0
        %1201 = vmatprep.subr.bf16.mxu0 0
        %1202 = vmatpush1.bf16.xpose.msra.mxu0 0
        %1203 = vmatprep.subr.bf16.mxu0 0
        %1204 = vmatpush1.bf16.xpose.msra.mxu0 0
        %1205 = vmatprep.subr.bf16.mxu0 0
        %1206 = vmatpush1.bf16.xpose.msra.mxu0 0
        %1207 = vmatprep.subr.bf16.mxu0 0
        %1208 = vmatpush1.bf16.xpose.msra.mxu0 0
        %1209 = vmatprep.subr.bf16.mxu0 0
        %1210 = vmatpush1.bf16.xpose.msra.mxu0 0
        %1211 = vmatprep.subr.bf16.mxu0 0
        %1212 = vmatpush1.bf16.xpose.msra.mxu0 0
        %1213 = vmatprep.subr.bf16.mxu0 0
        %1214 = vmatpush1.bf16.xpose.msra.mxu0 0
        %1215 = vmatprep.subr.bf16.mxu0 0
        %1216 = vmatpush1.bf16.xpose.msra.mxu0 0
        %1217 = vmatprep.subr.bf16.mxu0 0
        %1218 = vmatpush1.bf16.xpose.msra.mxu0 0
        %1219 = vmatprep.subr.bf16.mxu0 0
        %1220 = vmatpush1.bf16.xpose.msra.mxu0 0
        %1221 = vmatprep.subr.bf16.mxu0 0
        %1222 = vmatpush1.bf16.xpose.msra.mxu0 0
        %1223 = vmatprep.subr.bf16.mxu0 0
        %1224 = vmatpush1.bf16.xpose.msra.mxu0 0
        %1225 = vmatprep.subr.bf16.mxu0 0
        %1226 = vmatpush1.bf16.xpose.msra.mxu0 0
        %1227 = vmatprep.subr.bf16.mxu0 0
        %1228 = vmatpush1.bf16.xpose.msra.mxu0 0
        %1229 = vmatprep.mubr.bf16.mxu0 0
        %1230 = vmatmul.mubr.bf16.gmra.mrb[0].mxu0 %v1194
        %v1231 = vpop.f32.mrb[0].mxu0
        %v1232 = vadd.f32 0.0, %v1231
        %v1233 = vpop.f32.mrb[0].mxu0
        %v1234 = vpop.f32.mrb[0].mxu0
        %v1235 = vpop.f32.mrb[0].mxu0
        %1236 = vdwg.mxu0
        %vm1237 = vcmask 64512
        %v1238 = vsel %vm1237, %v1232, -inf
        %1239 = vmax.xlane.f32.xlu0 %v1238
        %v1240 = vpop.xlane.xlu0 %1239
        %v1241 = vsub.f32 %v1232, %v1240
        %v1242 = vmul.f32 %v1241, 1.442695
        %v1243 = vpow.pop %v1242
        %v1244 = vsel %vm1237, %v1243, 0.0
        %1245 = vadd.xlane.f32.xlu0 %v1244
        %v1246 = vpop.xlane.xlu0 %1245
        %v1247 = vrcp.pop %v1246
        %v1248 = vmul.f32 %v1243, %v1247
        %v1249 = vpack.c.bf16 %v1248, %v1248
        %v1251 = vsel %vm1237, %v1249, 0
        %vm1253 = vcmask 1043456
        %v1255 = vsel %vm1253, %v1196, 0
        %1257 = vmatprep.subr.bf16.mxu0 0
        %1258 = vmatpush1.bf16.msra.mxu0 %v1255
        %1259 = vmatprep.subr.bf16.mxu0 0
        %1260 = vmatpush1.bf16.msra.mxu0 0
        %1261 = vmatprep.subr.bf16.mxu0 0
        %1262 = vmatpush1.bf16.msra.mxu0 0
        %1263 = vmatprep.subr.bf16.mxu0 0
        %1264 = vmatpush1.bf16.msra.mxu0 0
        %1265 = vmatprep.subr.bf16.mxu0 0
        %1266 = vmatpush1.bf16.msra.mxu0 0
        %1267 = vmatprep.subr.bf16.mxu0 0
        %1268 = vmatpush1.bf16.msra.mxu0 0
        %1269 = vmatprep.subr.bf16.mxu0 0
        %1270 = vmatpush1.bf16.msra.mxu0 0
        %1271 = vmatprep.subr.bf16.mxu0 0
        %1272 = vmatpush1.bf16.msra.mxu0 0
        %1273 = vmatprep.subr.bf16.mxu0 0
        %1274 = vmatpush1.bf16.msra.mxu0 0
        %1275 = vmatprep.subr.bf16.mxu0 0
        %1276 = vmatpush1.bf16.msra.mxu0 0
        %1277 = vmatprep.subr.bf16.mxu0 0
        %1278 = vmatpush1.bf16.msra.mxu0 0
        %1279 = vmatprep.subr.bf16.mxu0 0
        %1280 = vmatpush1.bf16.msra.mxu0 0
        %1281 = vmatprep.subr.bf16.mxu0 0
        %1282 = vmatpush1.bf16.msra.mxu0 0
        %1283 = vmatprep.subr.bf16.mxu0 0
        %1284 = vmatpush1.bf16.msra.mxu0 0
        %1285 = vmatprep.subr.bf16.mxu0 0
        %1286 = vmatpush1.bf16.msra.mxu0 0
        %1287 = vmatprep.subr.bf16.mxu0 0
        %1288 = vmatpush1.bf16.msra.mxu0 0
        %1289 = vmatprep.mubr.bf16.mxu0 0
        %1290 = vmatmul.mubr.bf16.gmra.mrb[0].mxu0 %v1251
        %v1291 = vpop.f32.mrb[0].mxu0
        %v1292 = vadd.f32 0.0, %v1291
        %v1293 = vpop.f32.mrb[0].mxu0
        %v1294 = vpop.f32.mrb[0].mxu0
        %v1295 = vpop.f32.mrb[0].mxu0
        %1296 = vdwg.mxu0
        %v1297 = vpack.c.bf16 %v1292, %v1292
        %v1298 = vld [vmem:[#allocation2 + $0xb0] sm:$0xf]
        %v1299 = vld [vmem:[#allocation2 + $0xb4] sm:$0xf]
        %v1300 = vld [vmem:[#allocation2 + $0xb8] sm:$0xf]
        %v1301 = vld [vmem:[#allocation2 + $0xbc] sm:$0xf]
        %v1302 = vld [vmem:[#allocation2 + $0xc0] sm:$0xf]
        %v1303 = vld [vmem:[#allocation2 + $0xc4] sm:$0xf]
        %v1304 = vld [vmem:[#allocation2 + $0xc8] sm:$0xf]
        %v1305 = vld [vmem:[#allocation2 + $0xcc] sm:$0xf]
        %v1306 = vld [vmem:[#allocation2 + $0xd0] sm:$0xf]
        %v1307 = vld [vmem:[#allocation2 + $0xd4] sm:$0xf]
        %v1308 = vld [vmem:[#allocation2 + $0xd8] sm:$0xf]
        %v1309 = vld [vmem:[#allocation2 + $0xdc] sm:$0xf]
        %v1310 = vld [vmem:[#allocation2 + $0xe0] sm:$0xf]
        %v1311 = vld [vmem:[#allocation2 + $0xe4] sm:$0xf]
        %v1312 = vld [vmem:[#allocation2 + $0xe8] sm:$0xf]
        %v1313 = vld [vmem:[#allocation2 + $0xec] sm:$0xf]
        %v1330 = vunpack.c.l.b16 %v1298
        %v1331 = vunpack.c.l.b16 %v1299
        %v1332 = vunpack.c.l.b16 %v1300
        %v1333 = vunpack.c.l.b16 %v1301
        %v1334 = vunpack.c.l.b16 %v1302
        %v1335 = vunpack.c.l.b16 %v1303
        %v1336 = vunpack.c.l.b16 %v1304
        %v1337 = vunpack.c.l.b16 %v1305
        %v1338 = vunpack.c.l.b16 %v1306
        %v1339 = vunpack.c.l.b16 %v1307
        %v1340 = vunpack.c.l.b16 %v1308
        %v1341 = vunpack.c.l.b16 %v1309
        %v1342 = vunpack.c.l.b16 %v1310
        %v1343 = vunpack.c.l.b16 %v1311
        %v1344 = vunpack.c.l.b16 %v1312
        %v1345 = vunpack.c.l.b16 %v1313
        %v1346 = vpack.c.b16 %v1331, %v1330
        %v1347 = vpack.c.b16 %v1333, %v1332
        %v1348 = vpack.c.b16 %v1335, %v1334
        %v1349 = vpack.c.b16 %v1337, %v1336
        %v1350 = vpack.c.b16 %v1339, %v1338
        %v1351 = vpack.c.b16 %v1341, %v1340
        %v1352 = vpack.c.b16 %v1343, %v1342
        %v1353 = vpack.c.b16 %v1345, %v1344
        %1362 = vmatprep.subr.bf16.mxu0 0
        %1363 = vmatpush1.bf16.msra.mxu0 %v1346
        %1364 = vmatprep.subr.bf16.mxu0 0
        %1365 = vmatpush1.bf16.msra.mxu0 %v1347
        %1366 = vmatprep.subr.bf16.mxu0 0
        %1367 = vmatpush1.bf16.msra.mxu0 %v1348
        %1368 = vmatprep.subr.bf16.mxu0 0
        %1369 = vmatpush1.bf16.msra.mxu0 %v1349
        %1370 = vmatprep.subr.bf16.mxu0 0
        %1371 = vmatpush1.bf16.msra.mxu0 %v1350
        %1372 = vmatprep.subr.bf16.mxu0 0
        %1373 = vmatpush1.bf16.msra.mxu0 %v1351
        %1374 = vmatprep.subr.bf16.mxu0 0
        %1375 = vmatpush1.bf16.msra.mxu0 %v1352
        %1376 = vmatprep.subr.bf16.mxu0 0
        %1377 = vmatpush1.bf16.msra.mxu0 %v1353
        %1378 = vmatprep.subr.bf16.mxu0 0
        %1379 = vmatpush1.bf16.msra.mxu0 0
        %1380 = vmatprep.subr.bf16.mxu0 0
        %1381 = vmatpush1.bf16.msra.mxu0 0
        %1382 = vmatprep.subr.bf16.mxu0 0
        %1383 = vmatpush1.bf16.msra.mxu0 0
        %1384 = vmatprep.subr.bf16.mxu0 0
        %1385 = vmatpush1.bf16.msra.mxu0 0
        %1386 = vmatprep.subr.bf16.mxu0 0
        %1387 = vmatpush1.bf16.msra.mxu0 0
        %1388 = vmatprep.subr.bf16.mxu0 0
        %1389 = vmatpush1.bf16.msra.mxu0 0
        %1390 = vmatprep.subr.bf16.mxu0 0
        %1391 = vmatpush1.bf16.msra.mxu0 0
        %1392 = vmatprep.subr.bf16.mxu0 0
        %1393 = vmatpush1.bf16.msra.mxu0 0
        %1394 = vmatprep.mubr.bf16.mxu0 0
        %1395 = vmatmul.mubr.bf16.gmra.mrb[0].mxu0 %v1297
        %v1396 = vpop.f32.mrb[0].mxu0
        %v1397 = vadd.f32 0.0, %v1396
        %v1398 = vpop.f32.mrb[0].mxu0
        %v1399 = vpop.f32.mrb[0].mxu0
        %v1400 = vpop.f32.mrb[0].mxu0
        %1401 = vdwg.mxu0
        %v1402 = vadd.f32 %v998, %v1397
        %v1403 = vsel %vm282, %v1402, 0.0
        %1404 = vadd.xlane.f32.xlu0 %v1403
        %v1405 = vpop.xlane.xlu0 %1404
        %v1406 = vmul.f32 %v1405, %v307
        %v1407 = vsub.f32 %v1402, %v1406
        %v1408 = vmul.f32 %v1407, %v1407
        %v1409 = vsel %vm282, %v1408, 0.0
        %1410 = vadd.xlane.f32.xlu0 %v1409
        %v1411 = vpop.xlane.xlu0 %1410
        %v1412 = vmul.f32 %v1411, %v307
        %v1413 = vadd.f32 %v1412, 1e-06
        %v1414 = vrsqrt.pop %v1413
        %v1415 = vmul.f32 %v1407, %v1414
        %v1416 = vlaneseq
        %v1417 = vshrl.u32 %v1416, 7
        %v1418 = vsub.s32 2, %v1417
        %v1419 = vrot.slane %v271, %v1418
        %v1420 = vmul.f32 %v1415, %v1419
        %v1421 = vlaneseq
        %v1422 = vshrl.u32 %v1421, 7
        %v1423 = vsub.s32 3, %v1422
        %v1424 = vrot.slane %v271, %v1423
        %v1425 = vadd.f32 %v1420, %v1424
        %v1426 = vpack.c.bf16 %v1425, %v1425
        %v1427 = vld [vmem:[#allocation2 + $0xf0] sm:$0xf]
        %v1428 = vld [vmem:[#allocation2 + $0xf4] sm:$0xf]
        %v1429 = vld [vmem:[#allocation2 + $0xf8] sm:$0xf]
        %v1430 = vld [vmem:[#allocation2 + $0xfc] sm:$0xf]
        %v1431 = vlaneseq
        %v1432 = vshrl.u32 %v1431, 7
        %v1433 = vsub.s32 4, %v1432
        %v1434 = vrot.slane %v271, %v1433
        %v1439 = vunpack.c.l.b16 %v1427
        %v1440 = vunpack.c.l.b16 %v1428
        %v1441 = vunpack.c.l.b16 %v1429
        %v1442 = vunpack.c.l.b16 %v1430
        %v1443 = vpack.c.b16 %v1440, %v1439
        %v1444 = vpack.c.b16 %v1442, %v1441
        %v1448 = vsel %vm282, %v1426, 0
        %1450 = vmatprep.subr.bf16.mxu0 0
        %1451 = vmatpush1.bf16.msra.mxu0 %v1443
        %1452 = vmatprep.subr.bf16.mxu0 0
        %1453 = vmatpush1.bf16.msra.mxu0 %v1444
        %1454 = vmatprep.subr.bf16.mxu0 0
        %1455 = vmatpush1.bf16.msra.mxu0 0
        %1456 = vmatprep.subr.bf16.mxu0 0
        %1457 = vmatpush1.bf16.msra.mxu0 0
        %1458 = vmatprep.subr.bf16.mxu0 0
        %1459 = vmatpush1.bf16.msra.mxu0 0
        %1460 = vmatprep.subr.bf16.mxu0 0
        %1461 = vmatpush1.bf16.msra.mxu0 0
        %1462 = vmatprep.subr.bf16.mxu0 0
        %1463 = vmatpush1.bf16.msra.mxu0 0
        %1464 = vmatprep.subr.bf16.mxu0 0
        %1465 = vmatpush1.bf16.msra.mxu0 0
        %1466 = vmatprep.subr.bf16.mxu0 0
        %1467 = vmatpush1.bf16.msra.mxu0 0
        %1468 = vmatprep.subr.bf16.mxu0 0
        %1469 = vmatpush1.bf16.msra.mxu0 0
        %1470 = vmatprep.subr.bf16.mxu0 0
        %1471 = vmatpush1.bf16.msra.mxu0 0
        %1472 = vmatprep.subr.bf16.mxu0 0
        %1473 = vmatpush1.bf16.msra.mxu0 0
        %1474 = vmatprep.subr.bf16.mxu0 0
        %1475 = vmatpush1.bf16.msra.mxu0 0
        %1476 = vmatprep.subr.bf16.mxu0 0
        %1477 = vmatpush1.bf16.msra.mxu0 0
        %1478 = vmatprep.subr.bf16.mxu0 0
        %1479 = vmatpush1.bf16.msra.mxu0 0
        %1480 = vmatprep.subr.bf16.mxu0 0
        %1481 = vmatpush1.bf16.msra.mxu0 0
        %1482 = vmatprep.mubr.bf16.mxu0 0
        %1483 = vmatmul.mubr.bf16.gmra.mrb[0].mxu0 %v1448
        %v1484 = vpop.f32.mrb[0].mxu0
        %v1485 = vadd.f32 %v1434, %v1484
        %v1486 = vpop.f32.mrb[0].mxu0
        %v1487 = vpop.f32.mrb[0].mxu0
        %v1488 = vpop.f32.mrb[0].mxu0
        %1489 = vdwg.mxu0
        %v1490 = vmax.f32 %v1485, 0.0
        %v1491 = vpack.c.bf16 %v1490, %v1490
        %v1492 = vld [vmem:[#allocation2 + $0x100] sm:$0xf]
        %v1493 = vld [vmem:[#allocation2 + $0x104] sm:$0xf]
        %v1494 = vld [vmem:[#allocation2 + $0x108] sm:$0xf]
        %v1495 = vld [vmem:[#allocation2 + $0x10c] sm:$0xf]
        %v1496 = vld [vmem:[#allocation2 + $0x110] sm:$0xf]
        %v1497 = vld [vmem:[#allocation2 + $0x114] sm:$0xf]
        %v1498 = vld [vmem:[#allocation2 + $0x118] sm:$0xf]
        %v1499 = vld [vmem:[#allocation2 + $0x11c] sm:$0xf]
        %v1500 = vld [vmem:[#allocation2 + $0x120] sm:$0xf]
        %v1501 = vld [vmem:[#allocation2 + $0x124] sm:$0xf]
        %v1502 = vld [vmem:[#allocation2 + $0x128] sm:$0xf]
        %v1503 = vld [vmem:[#allocation2 + $0x12c] sm:$0xf]
        %v1504 = vld [vmem:[#allocation2 + $0x130] sm:$0xf]
        %v1505 = vld [vmem:[#allocation2 + $0x134] sm:$0xf]
        %v1506 = vld [vmem:[#allocation2 + $0x138] sm:$0xf]
        %v1507 = vld [vmem:[#allocation2 + $0x13c] sm:$0xf]
        %v1524 = vunpack.c.l.b16 %v1492
        %v1525 = vunpack.c.l.b16 %v1493
        %v1526 = vunpack.c.l.b16 %v1494
        %v1527 = vunpack.c.l.b16 %v1495
        %v1528 = vunpack.c.l.b16 %v1496
        %v1529 = vunpack.c.l.b16 %v1497
        %v1530 = vunpack.c.l.b16 %v1498
        %v1531 = vunpack.c.l.b16 %v1499
        %v1532 = vunpack.c.l.b16 %v1500
        %v1533 = vunpack.c.l.b16 %v1501
        %v1534 = vunpack.c.l.b16 %v1502
        %v1535 = vunpack.c.l.b16 %v1503
        %v1536 = vunpack.c.l.b16 %v1504
        %v1537 = vunpack.c.l.b16 %v1505
        %v1538 = vunpack.c.l.b16 %v1506
        %v1539 = vunpack.c.l.b16 %v1507
        %v1540 = vpack.c.b16 %v1525, %v1524
        %v1541 = vpack.c.b16 %v1527, %v1526
        %v1542 = vpack.c.b16 %v1529, %v1528
        %v1543 = vpack.c.b16 %v1531, %v1530
        %v1544 = vpack.c.b16 %v1533, %v1532
        %v1545 = vpack.c.b16 %v1535, %v1534
        %v1546 = vpack.c.b16 %v1537, %v1536
        %v1547 = vpack.c.b16 %v1539, %v1538
        %1556 = vmatprep.subr.bf16.mxu0 0
        %1557 = vmatpush1.bf16.msra.mxu0 %v1540
        %1558 = vmatprep.subr.bf16.mxu0 0
        %1559 = vmatpush1.bf16.msra.mxu0 %v1541
        %1560 = vmatprep.subr.bf16.mxu0 0
        %1561 = vmatpush1.bf16.msra.mxu0 %v1542
        %1562 = vmatprep.subr.bf16.mxu0 0
        %1563 = vmatpush1.bf16.msra.mxu0 %v1543
        %1564 = vmatprep.subr.bf16.mxu0 0
        %1565 = vmatpush1.bf16.msra.mxu0 %v1544
        %1566 = vmatprep.subr.bf16.mxu0 0
        %1567 = vmatpush1.bf16.msra.mxu0 %v1545
        %1568 = vmatprep.subr.bf16.mxu0 0
        %1569 = vmatpush1.bf16.msra.mxu0 %v1546
        %1570 = vmatprep.subr.bf16.mxu0 0
        %1571 = vmatpush1.bf16.msra.mxu0 %v1547
        %1572 = vmatprep.subr.bf16.mxu0 0
        %1573 = vmatpush1.bf16.msra.mxu0 0
        %1574 = vmatprep.subr.bf16.mxu0 0
        %1575 = vmatpush1.bf16.msra.mxu0 0
        %1576 = vmatprep.subr.bf16.mxu0 0
        %1577 = vmatpush1.bf16.msra.mxu0 0
        %1578 = vmatprep.subr.bf16.mxu0 0
        %1579 = vmatpush1.bf16.msra.mxu0 0
        %1580 = vmatprep.subr.bf16.mxu0 0
        %1581 = vmatpush1.bf16.msra.mxu0 0
        %1582 = vmatprep.subr.bf16.mxu0 0
        %1583 = vmatpush1.bf16.msra.mxu0 0
        %1584 = vmatprep.subr.bf16.mxu0 0
        %1585 = vmatpush1.bf16.msra.mxu0 0
        %1586 = vmatprep.subr.bf16.mxu0 0
        %1587 = vmatpush1.bf16.msra.mxu0 0
        %1588 = vmatprep.mubr.bf16.mxu0 0
        %1589 = vmatmul.mubr.bf16.gmra.mrb[0].mxu0 %v1491
        %v1590 = vpop.f32.mrb[0].mxu0
        %v1591 = vadd.f32 0.0, %v1590
        %v1592 = vpop.f32.mrb[0].mxu0
        %v1593 = vpop.f32.mrb[0].mxu0
        %v1594 = vpop.f32.mrb[0].mxu0
        %1595 = vdwg.mxu0
        %v1596 = vadd.f32 %v1402, %v1591
        %v1597 = vlaneseq
        %v1598 = vshrl.u32 %v1597, 7
        %v1599 = vsub.s32 5, %v1598
        %v1600 = vrot.slane %v271, %v1599
        %v1601 = vadd.f32 %v1596, %v1600
        %1602 = vst.msk [vmem:[%s256] sm:$0xff] %vm282, %v998
        %1604 = vrot.lane.b32.xlu0 %v1601, 32
        %v1605 = vpop.permute.xlu0 %1604
        %vm1607 = vcmask 523520
        %1608 = vst.msk [vmem:[%s256] sm:$0xff] %vm1607, %v1605
        %1610 = vrot.lane.b32.xlu0 %v748, 64
        %v1611 = vpop.permute.xlu0 %1610
        %vm1613 = vcmask 1048064
        %1614 = vst.msk [vmem:[%s256] sm:$0xff] %vm1613, %v1611
        %s1615 = sand.u32 %s148, 1
        %s1616 = scalar_lea.sflag [#allocation4], %s1615
        %s1617 = sand.u32 %s148, 1
        %s1618 = smul.addr %s1617, 8
        %s1619 = scalar_lea.vmem [#allocation5], %s1618
        // Predicated region
        $region45: #{tpu_custom_call.1} parent=39 // pred_check
          %p1620 = pneg %p158
        $region46: #{tpu_custom_call.1} parent=39 // pred_check_branch
          %1622 = sbr.rel (%p1620) target = $region48
        $region47: #{tpu_custom_call.1} parent=39 // pred_region
          %s1624 = ssub.s32 128, 128
          %1625 = vsyncadd %s1616, %s1624
          %s1626 = smul.addr %s20, 128
          %s1627 = scalar_lea.hbm %s5, %s1626
          %s1629 = sshll.u32 %s1619, 4
          %s1630 = int_to_ptr.vmem [resolvable:$true] %s1629
          %1632 = dma.vmem_to_hbm [thread:$0]  %s1630, 128, %s1627, %s1616
        $region48: #{tpu_custom_call.1} parent=39 // pred_fallthru
          _
      $region40: #{tpu_custom_call.1} parent=5 // pred_fallthru
        _
      %p1633 = scmp.le.s32.totalorder 2, %s15
      // Predicated region
      $region49: #{tpu_custom_call.1} parent=5 // pred_check
        %p1634 = pneg %p1633
      $region50: #{tpu_custom_call.1} parent=5 // pred_check_branch
        %1636 = sbr.rel (%p1634) target = $region52
      $region51: #{tpu_custom_call.1} parent=5 // pred_region
        %s1637 = ssub.s32 %s15, 2
        // Predicated region
        $region53: #{tpu_custom_call.1} parent=51 // pred_check
          %p1638 = pneg %p164
        $region54: #{tpu_custom_call.1} parent=51 // pred_check_branch
          %1640 = sbr.rel (%p1638) target = $region56
        $region55: #{tpu_custom_call.1} parent=51 // pred_region
          %s1641 = sand.u32 %s149, 1
          %s1642 = scalar_lea.sflag [#allocation4], %s1641
          %s1643 = sand.u32 %s149, 1
          %s1644 = smul.addr %s1643, 8
          %s1645 = scalar_lea.vmem [#allocation5], %s1644
          %1646 = dma.done %s1642, 128
        $region56: #{tpu_custom_call.1} parent=51 // pred_fallthru
          _
      $region52: #{tpu_custom_call.1} parent=5 // pred_fallthru
        _
    $region6: #{tpu_custom_call.1} parent=1 // loop_footer
      %s19 = sadd.s32 1, %s15
    $region7: #{tpu_custom_call.1} parent=1 // loop_footer_branch
      %14 = sbr.rel target = $region3
    $region8: #{tpu_custom_call.1} parent=1 // loop_exit
      _
    %1647 = vsyncpa [#allocation3], 1
    %s1648 = scalar_lea.sflag [#allocation3], 1
    %1649 = vsyncpa %s1648, 1
    %1650 = vsyncpa [#allocation4], 1
    %s1651 = scalar_lea.sflag [#allocation4], 1
    %1652 = vsyncpa %s1651, 1

</llo_original>
